<compile_context>
chip_gen: v5e
topology: v5e:2x2
jax: 0.10.0
libtpu: 0.0.40
codegen_flags: <defaults>
</compile_context>

<pallas_src>
import functools
import math

import jax
import jax.numpy as jnp
import numpy as np
from jax.experimental import pallas as pl
from jax.experimental.pallas import tpu as pltpu


def _mha_kernel(q_ref, k_ref, v_ref,
                wq_ref, bq_ref, wk_ref, bk_ref, wv_ref, bv_ref,
                wo_ref, bo_ref,
                out_ref, attn_ref,
                o_scratch,
                *, heads, d_k):
    # Block shapes (one batch element per grid step):
    #   q_ref/k_ref/v_ref : (1, S, D)    w*_ref : (D, D)    b*_ref : (1, D)
    #   out_ref : (1, S, D)              attn_ref : (1, H, S, S)
    #   o_scratch : (S, D) VMEM scratch holding the concatenated head outputs.
    xq = q_ref[0]          # [S, D]
    xk = k_ref[0]
    xv = v_ref[0]

    q = jnp.dot(xq, wq_ref[...], preferred_element_type=jnp.float32) + bq_ref[...]
    k = jnp.dot(xk, wk_ref[...], preferred_element_type=jnp.float32) + bk_ref[...]
    v = jnp.dot(xv, wv_ref[...], preferred_element_type=jnp.float32) + bv_ref[...]

    inv_sqrt_dk = 1.0 / math.sqrt(d_k)

    # Head h lives in columns [h*d_k, (h+1)*d_k): identical to PyTorch's
    # .view(bs, -1, h, d_k).transpose(1, 2) split.  `heads` is a small static
    # Python int, so this loop unrolls fully (no per-head grid steps).
    for h in range(heads):
        lo = h * d_k
        qh = q[:, lo:lo + d_k]      # [S, d_k]
        kh = k[:, lo:lo + d_k]
        vh = v[:, lo:lo + d_k]

        s = jnp.dot(qh, kh.T, preferred_element_type=jnp.float32) * inv_sqrt_dk
        s = s - jnp.max(s, axis=-1, keepdims=True)        # numerically-stable softmax
        p = jnp.exp(s)
        p = p / jnp.sum(p, axis=-1, keepdims=True)        # [S, S]

        attn_ref[0, h, :, :] = p
        o_scratch[:, lo:lo + d_k] = jnp.dot(p, vh, preferred_element_type=jnp.float32)

    out_ref[0] = (
        jnp.dot(o_scratch[...], wo_ref[...], preferred_element_type=jnp.float32)
        + bo_ref[...]
    ).astype(out_ref.dtype)


def multi_head_attention(q, k, v, params, heads):
    """q, k, v: [B, S, D] float32.  params: (Wq, bq, Wk, bk, Wv, bv, Wo, bo) where
    each W is [D, D] laid out as (in, out) (i.e. already transposed vs nn.Linear.weight)
    and each b is [D].  Returns (output [B, S, D], attn [B, H, S, S])."""
    B, S, D = q.shape
    assert D % heads == 0
    d_k = D // heads
    wq, bq, wk, bk, wv, bv, wo, bo = params
    # Biases as (1, D) 2-D slabs so they live as ordinary VMEM tiles.
    bq, bk, bv, bo = (b.reshape(1, D) for b in (bq, bk, bv, bo))

    kernel = functools.partial(_mha_kernel, heads=heads, d_k=d_k)

    x_spec = pl.BlockSpec((1, S, D), lambda b: (b, 0, 0))
    # Constant block index => weights/biases stay VMEM-resident across batch steps.
    w_spec = pl.BlockSpec((D, D), lambda b: (0, 0))
    b_spec = pl.BlockSpec((1, D), lambda b: (0, 0))

    out, attn = pl.pallas_call(
        kernel,
        out_shape=(
            jax.ShapeDtypeStruct((B, S, D), q.dtype),
            jax.ShapeDtypeStruct((B, heads, S, S), jnp.float32),
        ),
        grid=(B,),
        in_specs=[
            x_spec, x_spec, x_spec,
            w_spec, b_spec,   # Wq, bq
            w_spec, b_spec,   # Wk, bk
            w_spec, b_spec,   # Wv, bv
            w_spec, b_spec,   # Wo, bo
        ],
        out_specs=(
            pl.BlockSpec((1, S, D), lambda b: (b, 0, 0)),
            pl.BlockSpec((1, heads, S, S), lambda b: (b, 0, 0, 0)),
        ),
        scratch_shapes=[pltpu.VMEM((S, D), jnp.float32)],
        compiler_params=pltpu.CompilerParams(
            dimension_semantics=("parallel",),
        ),
    )(q, k, v, wq, bq, wk, bk, wv, bv, wo, bo)
    return out, attn


def _ref_mha_numpy(q, k, v, params, heads):
    """float64 numpy reference (ground truth, independent of MXU precision)."""
    q, k, v = (np.asarray(a, dtype=np.float64) for a in (q, k, v))
    wq, bq, wk, bk, wv, bv, wo, bo = (np.asarray(p, dtype=np.float64) for p in params)
    B, S, D = q.shape
    d_k = D // heads

    def split(x):  # [B,S,D] -> [B,H,S,d_k]
        return x.reshape(B, S, heads, d_k).transpose(0, 2, 1, 3)

    Q = split(q @ wq + bq)
    K = split(k @ wk + bk)
    V = split(v @ wv + bv)
    scores = Q @ K.transpose(0, 1, 3, 2) / math.sqrt(d_k)
    scores = scores - scores.max(axis=-1, keepdims=True)
    e = np.exp(scores)
    attn = e / e.sum(axis=-1, keepdims=True)
    o = (attn @ V).transpose(0, 2, 1, 3).reshape(B, S, D)
    out = o @ wo + bo
    return out, attn


if __name__ == "__main__":
    heads, d_model = 4, 32
    B, S = 2, 8

    key = jax.random.PRNGKey(0)
    keys = jax.random.split(key, 12)
    q = jax.random.normal(keys[0], (B, S, d_model), dtype=jnp.float32)
    k = jax.random.normal(keys[1], (B, S, d_model), dtype=jnp.float32)
    v = jax.random.normal(keys[2], (B, S, d_model), dtype=jnp.float32)

    wscale = 1.0 / math.sqrt(d_model)
    params = (
        jax.random.normal(keys[3], (d_model, d_model), jnp.float32) * wscale,   # Wq
        jax.random.normal(keys[4], (d_model,), jnp.float32) * 0.1,              # bq
        jax.random.normal(keys[5], (d_model, d_model), jnp.float32) * wscale,   # Wk
        jax.random.normal(keys[6], (d_model,), jnp.float32) * 0.1,              # bk
        jax.random.normal(keys[7], (d_model, d_model), jnp.float32) * wscale,   # Wv
        jax.random.normal(keys[8], (d_model,), jnp.float32) * 0.1,              # bv
        jax.random.normal(keys[9], (d_model, d_model), jnp.float32) * wscale,   # Wo
        jax.random.normal(keys[10], (d_model,), jnp.float32) * 0.1,             # bo
    )

    out, attn = multi_head_attention(q, k, v, params, heads)
    out, attn = jax.block_until_ready((out, attn))

    ref_out, ref_attn = _ref_mha_numpy(q, k, v, params, heads)

    # Tolerance covers MXU default-precision matmul passes vs the float64 reference;
    # structural bugs (wrong head split, missing 1/sqrt(d_k), missing bias) blow far past it.
    assert np.allclose(np.asarray(out), ref_out, atol=2e-2, rtol=2e-2), "output mismatch"
    assert np.allclose(np.asarray(attn), ref_attn, atol=2e-2, rtol=2e-2), "attn mismatch"

    print("KERNEL_OK")
</pallas_src>

<mosaic_0001>
module attributes {stable_mosaic.version = 11 : i64} {
  func.func @_mha_kernel(%arg0: i32, %arg1: memref<1x8x32xf32, #tpu.memory_space<vmem>>, %arg2: memref<1x8x32xf32, #tpu.memory_space<vmem>>, %arg3: memref<1x8x32xf32, #tpu.memory_space<vmem>>, %arg4: memref<32x32xf32, #tpu.memory_space<vmem>>, %arg5: memref<1x32xf32, #tpu.memory_space<vmem>>, %arg6: memref<32x32xf32, #tpu.memory_space<vmem>>, %arg7: memref<1x32xf32, #tpu.memory_space<vmem>>, %arg8: memref<32x32xf32, #tpu.memory_space<vmem>>, %arg9: memref<1x32xf32, #tpu.memory_space<vmem>>, %arg10: memref<32x32xf32, #tpu.memory_space<vmem>>, %arg11: memref<1x32xf32, #tpu.memory_space<vmem>>, %arg12: memref<1x8x32xf32, #tpu.memory_space<vmem>>, %arg13: memref<1x4x8x8xf32, #tpu.memory_space<vmem>>, %arg14: memref<8x32xf32, #tpu.memory_space<vmem>>) attributes {dimension_semantics = [#tpu.dimension_semantics<parallel>], iteration_bounds = array<i64: 2>, scalar_prefetch = 0 : i64, scratch_operands = 1 : i64, tpu.core_type = #tpu.core_type<tc>, window_params = [{transform_indices = @transform_0, window_bounds = array<i64: 1, 8, 32>}, {transform_indices = @transform_1, window_bounds = array<i64: 1, 8, 32>}, {transform_indices = @transform_2, window_bounds = array<i64: 1, 8, 32>}, {pipeline_mode = #tpu.pipeline_mode<synchronous>, transform_indices = @transform_3, window_bounds = array<i64: 32, 32>}, {pipeline_mode = #tpu.pipeline_mode<synchronous>, transform_indices = @transform_4, window_bounds = array<i64: 1, 32>}, {pipeline_mode = #tpu.pipeline_mode<synchronous>, transform_indices = @transform_5, window_bounds = array<i64: 32, 32>}, {pipeline_mode = #tpu.pipeline_mode<synchronous>, transform_indices = @transform_6, window_bounds = array<i64: 1, 32>}, {pipeline_mode = #tpu.pipeline_mode<synchronous>, transform_indices = @transform_7, window_bounds = array<i64: 32, 32>}, {pipeline_mode = #tpu.pipeline_mode<synchronous>, transform_indices = @transform_8, window_bounds = array<i64: 1, 32>}, {pipeline_mode = #tpu.pipeline_mode<synchronous>, transform_indices = @transform_9, window_bounds = array<i64: 32, 32>}, {pipeline_mode = #tpu.pipeline_mode<synchronous>, transform_indices = @transform_10, window_bounds = array<i64: 1, 32>}, {transform_indices = @transform_11, window_bounds = array<i64: 1, 8, 32>}, {transform_indices = @transform_12, window_bounds = array<i64: 1, 4, 8, 8>}]} {
    %c0 = arith.constant 0 : index
    %c0_0 = arith.constant 0 : index
    %c0_1 = arith.constant 0 : index
    %0 = vector.load %arg1[%c0, %c0_0, %c0_1] : memref<1x8x32xf32, #tpu.memory_space<vmem>>, vector<1x8x32xf32>
    %1 = vector.shape_cast %0 : vector<1x8x32xf32> to vector<8x32xf32>
    %c0_2 = arith.constant 0 : index
    %c0_3 = arith.constant 0 : index
    %c0_4 = arith.constant 0 : index
    %2 = vector.load %arg2[%c0_2, %c0_3, %c0_4] : memref<1x8x32xf32, #tpu.memory_space<vmem>>, vector<1x8x32xf32>
    %3 = vector.shape_cast %2 : vector<1x8x32xf32> to vector<8x32xf32>
    %c0_5 = arith.constant 0 : index
    %c0_6 = arith.constant 0 : index
    %c0_7 = arith.constant 0 : index
    %4 = vector.load %arg3[%c0_5, %c0_6, %c0_7] : memref<1x8x32xf32, #tpu.memory_space<vmem>>, vector<1x8x32xf32>
    %5 = vector.shape_cast %4 : vector<1x8x32xf32> to vector<8x32xf32>
    %c0_8 = arith.constant 0 : index
    %c0_9 = arith.constant 0 : index
    %6 = vector.load %arg4[%c0_8, %c0_9] : memref<32x32xf32, #tpu.memory_space<vmem>>, vector<32x32xf32>
    %cst = arith.constant dense<0.000000e+00> : vector<8x32xf32>
    %7 = tpu.matmul %1, %6, %cst {dimension_numbers = #tpu.dot_dimension_numbers<[1], [0], [0], [1], [0, 0, 1, 1], [], []>} : vector<8x32xf32>, vector<32x32xf32>, vector<8x32xf32> -> vector<8x32xf32>
    %c0_10 = arith.constant 0 : index
    %c0_11 = arith.constant 0 : index
    %8 = vector.load %arg5[%c0_10, %c0_11] : memref<1x32xf32, #tpu.memory_space<vmem>>, vector<1x32xf32>
    %9 = vector.broadcast %8 : vector<1x32xf32> to vector<8x32xf32>
    %10 = arith.addf %7, %9 : vector<8x32xf32>
    %c0_12 = arith.constant 0 : index
    %c0_13 = arith.constant 0 : index
    %11 = vector.load %arg6[%c0_12, %c0_13] : memref<32x32xf32, #tpu.memory_space<vmem>>, vector<32x32xf32>
    %cst_14 = arith.constant dense<0.000000e+00> : vector<8x32xf32>
    %12 = tpu.matmul %3, %11, %cst_14 {dimension_numbers = #tpu.dot_dimension_numbers<[1], [0], [0], [1], [0, 0, 1, 1], [], []>} : vector<8x32xf32>, vector<32x32xf32>, vector<8x32xf32> -> vector<8x32xf32>
    %c0_15 = arith.constant 0 : index
    %c0_16 = arith.constant 0 : index
    %13 = vector.load %arg7[%c0_15, %c0_16] : memref<1x32xf32, #tpu.memory_space<vmem>>, vector<1x32xf32>
    %14 = vector.broadcast %13 : vector<1x32xf32> to vector<8x32xf32>
    %15 = arith.addf %12, %14 : vector<8x32xf32>
    %c0_17 = arith.constant 0 : index
    %c0_18 = arith.constant 0 : index
    %16 = vector.load %arg8[%c0_17, %c0_18] : memref<32x32xf32, #tpu.memory_space<vmem>>, vector<32x32xf32>
    %cst_19 = arith.constant dense<0.000000e+00> : vector<8x32xf32>
    %17 = tpu.matmul %5, %16, %cst_19 {dimension_numbers = #tpu.dot_dimension_numbers<[1], [0], [0], [1], [0, 0, 1, 1], [], []>} : vector<8x32xf32>, vector<32x32xf32>, vector<8x32xf32> -> vector<8x32xf32>
    %c0_20 = arith.constant 0 : index
    %c0_21 = arith.constant 0 : index
    %18 = vector.load %arg9[%c0_20, %c0_21] : memref<1x32xf32, #tpu.memory_space<vmem>>, vector<1x32xf32>
    %19 = vector.broadcast %18 : vector<1x32xf32> to vector<8x32xf32>
    %20 = arith.addf %17, %19 : vector<8x32xf32>
    %21 = vector.extract_strided_slice %10 {offsets = [0, 0], sizes = [8, 8], strides = [1, 1]} : vector<8x32xf32> to vector<8x8xf32>
    %22 = vector.extract_strided_slice %15 {offsets = [0, 0], sizes = [8, 8], strides = [1, 1]} : vector<8x32xf32> to vector<8x8xf32>
    %23 = vector.extract_strided_slice %20 {offsets = [0, 0], sizes = [8, 8], strides = [1, 1]} : vector<8x32xf32> to vector<8x8xf32>
    %24 = tpu.transpose %22, [1, 0] : vector<8x8xf32> -> vector<8x8xf32>
    %cst_22 = arith.constant dense<0.000000e+00> : vector<8x8xf32>
    %25 = tpu.matmul %21, %24, %cst_22 {dimension_numbers = #tpu.dot_dimension_numbers<[1], [0], [0], [1], [0, 0, 1, 1], [], []>} : vector<8x8xf32>, vector<8x8xf32>, vector<8x8xf32> -> vector<8x8xf32>
    %cst_23 = arith.constant 0.353553385 : f32
    %26 = vector.broadcast %cst_23 : f32 to vector<8x8xf32>
    %27 = arith.mulf %25, %26 : vector<8x8xf32>
    %cst_24 = arith.constant dense<0xFF800000> : vector<8xf32>
    %28 = vector.multi_reduction <maximumf>, %27, %cst_24 [1] : vector<8x8xf32> to vector<8xf32>
    %29 = vector.shape_cast %28 : vector<8xf32> to vector<8x1xf32>
    %30 = vector.broadcast %29 : vector<8x1xf32> to vector<8x8xf32>
    %31 = arith.subf %27, %30 : vector<8x8xf32>
    %32 = math.exp %31 : vector<8x8xf32>
    %cst_25 = arith.constant dense<0.000000e+00> : vector<8xf32>
    %33 = vector.multi_reduction <add>, %32, %cst_25 [1] : vector<8x8xf32> to vector<8xf32>
    %34 = vector.shape_cast %33 : vector<8xf32> to vector<8x1xf32>
    %35 = vector.broadcast %34 : vector<8x1xf32> to vector<8x8xf32>
    %36 = arith.divf %32, %35 : vector<8x8xf32>
    %c0_26 = arith.constant 0 : index
    %c0_27 = arith.constant 0 : index
    %c0_28 = arith.constant 0 : index
    %c0_29 = arith.constant 0 : index
    %37 = vector.load %arg13[%c0_26, %c0_27, %c0_28, %c0_29] : memref<1x4x8x8xf32, #tpu.memory_space<vmem>>, vector<1x1x8x8xf32>
    %38 = vector.shape_cast %37 : vector<1x1x8x8xf32> to vector<8x8xf32>
    %39 = vector.shape_cast %36 : vector<8x8xf32> to vector<1x1x8x8xf32>
    tpu.vector_store %arg13[%c0_26, %c0_27, %c0_28, %c0_29], %39 {strides = array<i32>} : memref<1x4x8x8xf32, #tpu.memory_space<vmem>>, vector<1x1x8x8xf32>,
    %cst_30 = arith.constant dense<0.000000e+00> : vector<8x8xf32>
    %40 = tpu.matmul %36, %23, %cst_30 {dimension_numbers = #tpu.dot_dimension_numbers<[1], [0], [0], [1], [0, 0, 1, 1], [], []>} : vector<8x8xf32>, vector<8x8xf32>, vector<8x8xf32> -> vector<8x8xf32>
    %c0_31 = arith.constant 0 : index
    %c0_32 = arith.constant 0 : index
    %41 = vector.load %arg14[%c0_31, %c0_32] : memref<8x32xf32, #tpu.memory_space<vmem>>, vector<8x8xf32>
    tpu.vector_store %arg14[%c0_31, %c0_32], %40 {strides = array<i32>} : memref<8x32xf32, #tpu.memory_space<vmem>>, vector<8x8xf32>,
    %42 = vector.extract_strided_slice %10 {offsets = [0, 8], sizes = [8, 8], strides = [1, 1]} : vector<8x32xf32> to vector<8x8xf32>
    %43 = vector.extract_strided_slice %15 {offsets = [0, 8], sizes = [8, 8], strides = [1, 1]} : vector<8x32xf32> to vector<8x8xf32>
    %44 = vector.extract_strided_slice %20 {offsets = [0, 8], sizes = [8, 8], strides = [1, 1]} : vector<8x32xf32> to vector<8x8xf32>
    %45 = tpu.transpose %43, [1, 0] : vector<8x8xf32> -> vector<8x8xf32>
    %cst_33 = arith.constant dense<0.000000e+00> : vector<8x8xf32>
    %46 = tpu.matmul %42, %45, %cst_33 {dimension_numbers = #tpu.dot_dimension_numbers<[1], [0], [0], [1], [0, 0, 1, 1], [], []>} : vector<8x8xf32>, vector<8x8xf32>, vector<8x8xf32> -> vector<8x8xf32>
    %cst_34 = arith.constant 0.353553385 : f32
    %47 = vector.broadcast %cst_34 : f32 to vector<8x8xf32>
    %48 = arith.mulf %46, %47 : vector<8x8xf32>
    %cst_35 = arith.constant dense<0xFF800000> : vector<8xf32>
    %49 = vector.multi_reduction <maximumf>, %48, %cst_35 [1] : vector<8x8xf32> to vector<8xf32>
    %50 = vector.shape_cast %49 : vector<8xf32> to vector<8x1xf32>
    %51 = vector.broadcast %50 : vector<8x1xf32> to vector<8x8xf32>
    %52 = arith.subf %48, %51 : vector<8x8xf32>
    %53 = math.exp %52 : vector<8x8xf32>
    %cst_36 = arith.constant dense<0.000000e+00> : vector<8xf32>
    %54 = vector.multi_reduction <add>, %53, %cst_36 [1] : vector<8x8xf32> to vector<8xf32>
    %55 = vector.shape_cast %54 : vector<8xf32> to vector<8x1xf32>
    %56 = vector.broadcast %55 : vector<8x1xf32> to vector<8x8xf32>
    %57 = arith.divf %53, %56 : vector<8x8xf32>
    %c0_37 = arith.constant 0 : index
    %c1 = arith.constant 1 : index
    %c0_38 = arith.constant 0 : index
    %c0_39 = arith.constant 0 : index
    %58 = vector.load %arg13[%c0_37, %c1, %c0_38, %c0_39] : memref<1x4x8x8xf32, #tpu.memory_space<vmem>>, vector<1x1x8x8xf32>
    %59 = vector.shape_cast %58 : vector<1x1x8x8xf32> to vector<8x8xf32>
    %60 = vector.shape_cast %57 : vector<8x8xf32> to vector<1x1x8x8xf32>
    tpu.vector_store %arg13[%c0_37, %c1, %c0_38, %c0_39], %60 {strides = array<i32>} : memref<1x4x8x8xf32, #tpu.memory_space<vmem>>, vector<1x1x8x8xf32>,
    %cst_40 = arith.constant dense<0.000000e+00> : vector<8x8xf32>
    %61 = tpu.matmul %57, %44, %cst_40 {dimension_numbers = #tpu.dot_dimension_numbers<[1], [0], [0], [1], [0, 0, 1, 1], [], []>} : vector<8x8xf32>, vector<8x8xf32>, vector<8x8xf32> -> vector<8x8xf32>
    %c0_41 = arith.constant 0 : index
    %c8 = arith.constant 8 : index
    %62 = vector.load %arg14[%c0_41, %c8] : memref<8x32xf32, #tpu.memory_space<vmem>>, vector<8x8xf32>
    tpu.vector_store %arg14[%c0_41, %c8], %61 {strides = array<i32>} : memref<8x32xf32, #tpu.memory_space<vmem>>, vector<8x8xf32>,
    %63 = vector.extract_strided_slice %10 {offsets = [0, 16], sizes = [8, 8], strides = [1, 1]} : vector<8x32xf32> to vector<8x8xf32>
    %64 = vector.extract_strided_slice %15 {offsets = [0, 16], sizes = [8, 8], strides = [1, 1]} : vector<8x32xf32> to vector<8x8xf32>
    %65 = vector.extract_strided_slice %20 {offsets = [0, 16], sizes = [8, 8], strides = [1, 1]} : vector<8x32xf32> to vector<8x8xf32>
    %66 = tpu.transpose %64, [1, 0] : vector<8x8xf32> -> vector<8x8xf32>
    %cst_42 = arith.constant dense<0.000000e+00> : vector<8x8xf32>
    %67 = tpu.matmul %63, %66, %cst_42 {dimension_numbers = #tpu.dot_dimension_numbers<[1], [0], [0], [1], [0, 0, 1, 1], [], []>} : vector<8x8xf32>, vector<8x8xf32>, vector<8x8xf32> -> vector<8x8xf32>
    %cst_43 = arith.constant 0.353553385 : f32
    %68 = vector.broadcast %cst_43 : f32 to vector<8x8xf32>
    %69 = arith.mulf %67, %68 : vector<8x8xf32>
    %cst_44 = arith.constant dense<0xFF800000> : vector<8xf32>
    %70 = vector.multi_reduction <maximumf>, %69, %cst_44 [1] : vector<8x8xf32> to vector<8xf32>
    %71 = vector.shape_cast %70 : vector<8xf32> to vector<8x1xf32>
    %72 = vector.broadcast %71 : vector<8x1xf32> to vector<8x8xf32>
    %73 = arith.subf %69, %72 : vector<8x8xf32>
    %74 = math.exp %73 : vector<8x8xf32>
    %cst_45 = arith.constant dense<0.000000e+00> : vector<8xf32>
    %75 = vector.multi_reduction <add>, %74, %cst_45 [1] : vector<8x8xf32> to vector<8xf32>
    %76 = vector.shape_cast %75 : vector<8xf32> to vector<8x1xf32>
    %77 = vector.broadcast %76 : vector<8x1xf32> to vector<8x8xf32>
    %78 = arith.divf %74, %77 : vector<8x8xf32>
    %c0_46 = arith.constant 0 : index
    %c2 = arith.constant 2 : index
    %c0_47 = arith.constant 0 : index
    %c0_48 = arith.constant 0 : index
    %79 = vector.load %arg13[%c0_46, %c2, %c0_47, %c0_48] : memref<1x4x8x8xf32, #tpu.memory_space<vmem>>, vector<1x1x8x8xf32>
    %80 = vector.shape_cast %79 : vector<1x1x8x8xf32> to vector<8x8xf32>
    %81 = vector.shape_cast %78 : vector<8x8xf32> to vector<1x1x8x8xf32>
    tpu.vector_store %arg13[%c0_46, %c2, %c0_47, %c0_48], %81 {strides = array<i32>} : memref<1x4x8x8xf32, #tpu.memory_space<vmem>>, vector<1x1x8x8xf32>,
    %cst_49 = arith.constant dense<0.000000e+00> : vector<8x8xf32>
    %82 = tpu.matmul %78, %65, %cst_49 {dimension_numbers = #tpu.dot_dimension_numbers<[1], [0], [0], [1], [0, 0, 1, 1], [], []>} : vector<8x8xf32>, vector<8x8xf32>, vector<8x8xf32> -> vector<8x8xf32>
    %c0_50 = arith.constant 0 : index
    %c16 = arith.constant 16 : index
    %83 = vector.load %arg14[%c0_50, %c16] : memref<8x32xf32, #tpu.memory_space<vmem>>, vector<8x8xf32>
    tpu.vector_store %arg14[%c0_50, %c16], %82 {strides = array<i32>} : memref<8x32xf32, #tpu.memory_space<vmem>>, vector<8x8xf32>,
    %84 = vector.extract_strided_slice %10 {offsets = [0, 24], sizes = [8, 8], strides = [1, 1]} : vector<8x32xf32> to vector<8x8xf32>
    %85 = vector.extract_strided_slice %15 {offsets = [0, 24], sizes = [8, 8], strides = [1, 1]} : vector<8x32xf32> to vector<8x8xf32>
    %86 = vector.extract_strided_slice %20 {offsets = [0, 24], sizes = [8, 8], strides = [1, 1]} : vector<8x32xf32> to vector<8x8xf32>
    %87 = tpu.transpose %85, [1, 0] : vector<8x8xf32> -> vector<8x8xf32>
    %cst_51 = arith.constant dense<0.000000e+00> : vector<8x8xf32>
    %88 = tpu.matmul %84, %87, %cst_51 {dimension_numbers = #tpu.dot_dimension_numbers<[1], [0], [0], [1], [0, 0, 1, 1], [], []>} : vector<8x8xf32>, vector<8x8xf32>, vector<8x8xf32> -> vector<8x8xf32>
    %cst_52 = arith.constant 0.353553385 : f32
    %89 = vector.broadcast %cst_52 : f32 to vector<8x8xf32>
    %90 = arith.mulf %88, %89 : vector<8x8xf32>
    %cst_53 = arith.constant dense<0xFF800000> : vector<8xf32>
    %91 = vector.multi_reduction <maximumf>, %90, %cst_53 [1] : vector<8x8xf32> to vector<8xf32>
    %92 = vector.shape_cast %91 : vector<8xf32> to vector<8x1xf32>
    %93 = vector.broadcast %92 : vector<8x1xf32> to vector<8x8xf32>
    %94 = arith.subf %90, %93 : vector<8x8xf32>
    %95 = math.exp %94 : vector<8x8xf32>
    %cst_54 = arith.constant dense<0.000000e+00> : vector<8xf32>
    %96 = vector.multi_reduction <add>, %95, %cst_54 [1] : vector<8x8xf32> to vector<8xf32>
    %97 = vector.shape_cast %96 : vector<8xf32> to vector<8x1xf32>
    %98 = vector.broadcast %97 : vector<8x1xf32> to vector<8x8xf32>
    %99 = arith.divf %95, %98 : vector<8x8xf32>
    %c0_55 = arith.constant 0 : index
    %c3 = arith.constant 3 : index
    %c0_56 = arith.constant 0 : index
    %c0_57 = arith.constant 0 : index
    %100 = vector.load %arg13[%c0_55, %c3, %c0_56, %c0_57] : memref<1x4x8x8xf32, #tpu.memory_space<vmem>>, vector<1x1x8x8xf32>
    %101 = vector.shape_cast %100 : vector<1x1x8x8xf32> to vector<8x8xf32>
    %102 = vector.shape_cast %99 : vector<8x8xf32> to vector<1x1x8x8xf32>
    tpu.vector_store %arg13[%c0_55, %c3, %c0_56, %c0_57], %102 {strides = array<i32>} : memref<1x4x8x8xf32, #tpu.memory_space<vmem>>, vector<1x1x8x8xf32>,
    %cst_58 = arith.constant dense<0.000000e+00> : vector<8x8xf32>
    %103 = tpu.matmul %99, %86, %cst_58 {dimension_numbers = #tpu.dot_dimension_numbers<[1], [0], [0], [1], [0, 0, 1, 1], [], []>} : vector<8x8xf32>, vector<8x8xf32>, vector<8x8xf32> -> vector<8x8xf32>
    %c0_59 = arith.constant 0 : index
    %c24 = arith.constant 24 : index
    %104 = vector.load %arg14[%c0_59, %c24] : memref<8x32xf32, #tpu.memory_space<vmem>>, vector<8x8xf32>
    tpu.vector_store %arg14[%c0_59, %c24], %103 {strides = array<i32>} : memref<8x32xf32, #tpu.memory_space<vmem>>, vector<8x8xf32>,
    %c0_60 = arith.constant 0 : index
    %c0_61 = arith.constant 0 : index
    %105 = vector.load %arg14[%c0_60, %c0_61] : memref<8x32xf32, #tpu.memory_space<vmem>>, vector<8x32xf32>
    %c0_62 = arith.constant 0 : index
    %c0_63 = arith.constant 0 : index
    %106 = vector.load %arg10[%c0_62, %c0_63] : memref<32x32xf32, #tpu.memory_space<vmem>>, vector<32x32xf32>
    %cst_64 = arith.constant dense<0.000000e+00> : vector<8x32xf32>
    %107 = tpu.matmul %105, %106, %cst_64 {dimension_numbers = #tpu.dot_dimension_numbers<[1], [0], [0], [1], [0, 0, 1, 1], [], []>} : vector<8x32xf32>, vector<32x32xf32>, vector<8x32xf32> -> vector<8x32xf32>
    %c0_65 = arith.constant 0 : index
    %c0_66 = arith.constant 0 : index
    %108 = vector.load %arg11[%c0_65, %c0_66] : memref<1x32xf32, #tpu.memory_space<vmem>>, vector<1x32xf32>
    %109 = vector.broadcast %108 : vector<1x32xf32> to vector<8x32xf32>
    %110 = arith.addf %107, %109 : vector<8x32xf32>
    %c0_67 = arith.constant 0 : index
    %c0_68 = arith.constant 0 : index
    %c0_69 = arith.constant 0 : index
    %111 = vector.load %arg12[%c0_67, %c0_68, %c0_69] : memref<1x8x32xf32, #tpu.memory_space<vmem>>, vector<1x8x32xf32>
    %112 = vector.shape_cast %111 : vector<1x8x32xf32> to vector<8x32xf32>
    %113 = vector.shape_cast %110 : vector<8x32xf32> to vector<1x8x32xf32>
    tpu.vector_store %arg12[%c0_67, %c0_68, %c0_69], %113 {strides = array<i32>} : memref<1x8x32xf32, #tpu.memory_space<vmem>>, vector<1x8x32xf32>,
    return
  }
  func.func @transform_0(%arg0: i32) -> (i32, i32, i32) {
    %c0_i32 = arith.constant 0 : i32
    %c0_i32_0 = arith.constant 0 : i32
    %c0_i32_1 = arith.constant 0 : i32
    return %arg0, %c0_i32, %c0_i32_0 : i32, i32, i32
  }
  func.func @transform_1(%arg0: i32) -> (i32, i32, i32) {
    %c0_i32 = arith.constant 0 : i32
    %c0_i32_0 = arith.constant 0 : i32
    %c0_i32_1 = arith.constant 0 : i32
    return %arg0, %c0_i32, %c0_i32_0 : i32, i32, i32
  }
  func.func @transform_2(%arg0: i32) -> (i32, i32, i32) {
    %c0_i32 = arith.constant 0 : i32
    %c0_i32_0 = arith.constant 0 : i32
    %c0_i32_1 = arith.constant 0 : i32
    return %arg0, %c0_i32, %c0_i32_0 : i32, i32, i32
  }
  func.func @transform_3(%arg0: i32) -> (i32, i32) {
    %c0_i32 = arith.constant 0 : i32
    %c0_i32_0 = arith.constant 0 : i32
    %c0_i32_1 = arith.constant 0 : i32
    return %c0_i32, %c0_i32_0 : i32, i32
  }
  func.func @transform_4(%arg0: i32) -> (i32, i32) {
    %c0_i32 = arith.constant 0 : i32
    %c0_i32_0 = arith.constant 0 : i32
    %c0_i32_1 = arith.constant 0 : i32
    return %c0_i32, %c0_i32_0 : i32, i32
  }
  func.func @transform_5(%arg0: i32) -> (i32, i32) {
    %c0_i32 = arith.constant 0 : i32
    %c0_i32_0 = arith.constant 0 : i32
    %c0_i32_1 = arith.constant 0 : i32
    return %c0_i32, %c0_i32_0 : i32, i32
  }
  func.func @transform_6(%arg0: i32) -> (i32, i32) {
    %c0_i32 = arith.constant 0 : i32
    %c0_i32_0 = arith.constant 0 : i32
    %c0_i32_1 = arith.constant 0 : i32
    return %c0_i32, %c0_i32_0 : i32, i32
  }
  func.func @transform_7(%arg0: i32) -> (i32, i32) {
    %c0_i32 = arith.constant 0 : i32
    %c0_i32_0 = arith.constant 0 : i32
    %c0_i32_1 = arith.constant 0 : i32
    return %c0_i32, %c0_i32_0 : i32, i32
  }
  func.func @transform_8(%arg0: i32) -> (i32, i32) {
    %c0_i32 = arith.constant 0 : i32
    %c0_i32_0 = arith.constant 0 : i32
    %c0_i32_1 = arith.constant 0 : i32
    return %c0_i32, %c0_i32_0 : i32, i32
  }
  func.func @transform_9(%arg0: i32) -> (i32, i32) {
    %c0_i32 = arith.constant 0 : i32
    %c0_i32_0 = arith.constant 0 : i32
    %c0_i32_1 = arith.constant 0 : i32
    return %c0_i32, %c0_i32_0 : i32, i32
  }
  func.func @transform_10(%arg0: i32) -> (i32, i32) {
    %c0_i32 = arith.constant 0 : i32
    %c0_i32_0 = arith.constant 0 : i32
    %c0_i32_1 = arith.constant 0 : i32
    return %c0_i32, %c0_i32_0 : i32, i32
  }
  func.func @transform_11(%arg0: i32) -> (i32, i32, i32) {
    %c0_i32 = arith.constant 0 : i32
    %c0_i32_0 = arith.constant 0 : i32
    %c0_i32_1 = arith.constant 0 : i32
    return %arg0, %c0_i32, %c0_i32_0 : i32, i32, i32
  }
  func.func @transform_12(%arg0: i32) -> (i32, i32, i32, i32) {
    %c0_i32 = arith.constant 0 : i32
    %c0_i32_0 = arith.constant 0 : i32
    %c0_i32_1 = arith.constant 0 : i32
    %c0_i32_2 = arith.constant 0 : i32
    return %arg0, %c0_i32, %c0_i32_0, %c0_i32_1 : i32, i32, i32, i32
  }
}

</mosaic_0001>

<llo_original>
// kernel: tpu_custom_call.1
$region0: #{tpu_custom_call.1}
  #allocation0 [shape = 'u32[]', space=smem, size = 0x4, offset = 0x4, fixed_abs, tag = 'smem constant byte address 0x4 - core index']
  #allocation1 [shape = 'u32[72,128]{1,0:T(1,128)}', space=vmem, size = 0x9000, scoped, tag = 'internal scratch']
  #allocation2 [shape = 'f32[8,32]{1,0:T(8,128)}', space=vmem, size = 0x1000, scoped, tag = 'scratch operand']
  %s0 = inlined_call_operand.hbm [shape: f32[2,8,32], index: 0, kind: input, shape index: {}]
  %s1 = inlined_call_operand.hbm [shape: f32[2,8,32], index: 1, kind: input, shape index: {}]
  %s2 = inlined_call_operand.hbm [shape: f32[2,8,32], index: 2, kind: input, shape index: {}]
  %s3 = inlined_call_operand.hbm [shape: f32[32,32], index: 3, kind: input, shape index: {}]
  %s4 = inlined_call_operand.vmem [shape: f32[1,32], index: 4, kind: input, shape index: {}]
  %s5 = inlined_call_operand.hbm [shape: f32[32,32], index: 5, kind: input, shape index: {}]
  %s6 = inlined_call_operand.vmem [shape: f32[1,32], index: 6, kind: input, shape index: {}]
  %s7 = inlined_call_operand.hbm [shape: f32[32,32], index: 7, kind: input, shape index: {}]
  %s8 = inlined_call_operand.vmem [shape: f32[1,32], index: 8, kind: input, shape index: {}]
  %s9 = inlined_call_operand.hbm [shape: f32[32,32], index: 9, kind: input, shape index: {}]
  %s10 = inlined_call_operand.vmem [shape: f32[1,32], index: 10, kind: input, shape index: {}]
  %s11 = inlined_call_operand.hbm [shape: f32[2,8,32], index: 11, kind: output, shape index: {0}]
  %s12 = inlined_call_operand.hbm [shape: f32[2,4,8,8], index: 12, kind: output, shape index: {1}]
  %13 = xla_tuple %s11, %s12
  %s14 = sld [smem:[#allocation0]]
  $region113: #{tpu_custom_call.1} parent=0
    _
  %s16 = ssub.s32 1, %s14
  %s17 = scalar_select 0, %s16, %s14
  $region1: #{tpu_custom_call.1} parent=0
    #allocation3 [shape = 'u8[8192]{0}', space=vmem, size = 0x2000, scoped, tag = 'input window, operand 0']
    #allocation4 [shape = 's32[2]{0}', space=sflag, size = 0x8, scoped, tag = 'scoped memory for tpu_custom_call.1']
    #allocation5 [shape = 's32[2]{0}', space=sflag, size = 0x8, scoped, tag = 'scoped memory for tpu_custom_call.1']
    #allocation6 [shape = 'u8[8192]{0}', space=vmem, size = 0x2000, scoped, tag = 'input window, operand 1']
    #allocation7 [shape = 's32[2]{0}', space=sflag, size = 0x8, scoped, tag = 'scoped memory for tpu_custom_call.1']
    #allocation8 [shape = 'u8[8192]{0}', space=vmem, size = 0x2000, scoped, tag = 'input window, operand 2']
    #allocation9 [shape = 'u8[16384]{0}', space=vmem, size = 0x4000, scoped, tag = 'input window, operand 3, single buffered']
    #allocation10 [shape = 's32[1]{0}', space=sflag, size = 0x4, scoped, tag = 'scoped memory for tpu_custom_call.1']
    #allocation11 [shape = 'u8[16384]{0}', space=vmem, size = 0x4000, scoped, tag = 'input window, operand 5, single buffered']
    #allocation12 [shape = 'u8[16384]{0}', space=vmem, size = 0x4000, scoped, tag = 'input window, operand 7, single buffered']
    #allocation13 [shape = 's32[1]{0}', space=sflag, size = 0x4, scoped, tag = 'scoped memory for tpu_custom_call.1']
    #allocation14 [shape = 'u8[16384]{0}', space=vmem, size = 0x4000, scoped, tag = 'input window, operand 9, single buffered']
    #allocation15 [shape = 'u8[8192]{0}', space=vmem, size = 0x2000, scoped, tag = 'output window, operand 0']
    #allocation16 [shape = 'u8[32768]{0}', space=vmem, size = 0x8000, scoped, tag = 'output window, operand 1']
    #allocation17 [shape = 's32[2]{0}', space=sflag, size = 0x8, scoped, tag = 'scoped memory for tpu_custom_call.1']
    %18 = vsyncpa [#allocation4], 0
    %s19 = scalar_lea.sflag [#allocation4], 1
    %20 = vsyncpa %s19, 0
    %21 = vsyncpa [#allocation7], 0
    %s22 = scalar_lea.sflag [#allocation7], 1
    %23 = vsyncpa %s22, 0
    %24 = vsyncpa [#allocation10], 0
    %25 = vsyncpa [#allocation13], 0
    %26 = vsyncpa [#allocation5], 0
    %s27 = scalar_lea.sflag [#allocation5], 1
    %28 = vsyncpa %s27, 0
    %29 = vsyncpa [#allocation17], 0
    %s30 = scalar_lea.sflag [#allocation17], 1
    %31 = vsyncpa %s30, 0
    loop: start=0, step=1, limit=4
    $region2: #{tpu_custom_call.1} parent=1 // loop_pre_header
      _
    $region3: #{tpu_custom_call.1} parent=1 // loop_header
      %s33 = sphi 0, %s37
      %p34 = scmp.ge.s32.totalorder %s33, 4
      %s43 = sphi 0, %s45
      %s46 = sphi 0, %s43
      %s47 = sphi 0, %s46
      %s63 = sphi 0, %s47
      %s69 = sphi 0, %s71
      %s72 = sphi 0, %s69
      %s73 = sphi 0, %s72
      %s89 = sphi 0, %s73
      %s95 = sphi 0, %s97
      %s98 = sphi 0, %s95
      %s99 = sphi 0, %s98
      %s115 = sphi 0, %s99
      %s119 = sphi 0, %s119
      %s121 = sphi 0, %s119
      %s122 = sphi 0, %s121
      %s136 = sphi 0, %s122
      %s140 = sphi 0, %s140
      %s142 = sphi 0, %s140
      %s143 = sphi 0, %s142
      %s157 = sphi 0, %s143
      %s161 = sphi 0, %s161
      %s163 = sphi 0, %s161
      %s164 = sphi 0, %s163
      %s178 = sphi 0, %s164
      %s182 = sphi 0, %s182
      %s184 = sphi 0, %s182
      %s185 = sphi 0, %s184
      %s199 = sphi 0, %s185
      %s203 = sphi 0, %s203
      %s205 = sphi 0, %s203
      %s206 = sphi 0, %s205
      %s220 = sphi 0, %s206
      %s224 = sphi 0, %s224
      %s226 = sphi 0, %s224
      %s227 = sphi 0, %s226
      %s241 = sphi 0, %s227
      %s245 = sphi 0, %s245
      %s247 = sphi 0, %s245
      %s248 = sphi 0, %s247
      %s262 = sphi 0, %s248
      %s266 = sphi 0, %s266
      %s268 = sphi 0, %s266
      %s269 = sphi 0, %s268
      %s283 = sphi 0, %s269
      %s289 = sphi 0, %s291
      %s292 = sphi 0, %s289
      %s293 = sphi 0, %s292
      %s309 = sphi 0, %s293
      %s315 = sphi 0, %s317
      %s318 = sphi 0, %s315
      %s319 = sphi 0, %s318
      %s335 = sphi 0, %s319
    $region4: #{tpu_custom_call.1} parent=1 // loop_header_branch
      %36 = sbr.rel (%p34) target = $region8
    $region5: #{tpu_custom_call.1} parent=1 // loop_body
      %s38 = ssub.s32 %s33, 1
      %s39 = ssub.s32 %s33, 2
      %s40 = sadd.s32 %s33, 1
      %s41 = ssub.s32 %s33, %s40
      %p42 = scmp.eq.s32.totalorder %s41, 0
      %s44 = sadd.s32 %s43, 1
      %s45 = scalar_select %p42, %s43, %s44
      %p48 = pneg %p42
      %p49 = scmp.eq.s32.totalorder %s33, 1
      %p50 = por %p48, %p49
      %p51 = scmp.ne.s32.totalorder %s43, %s46
      %p52 = scmp.eq.s32.totalorder %s33, 0
      %p53 = por %p51, %p52
      %p54 = scmp.ne.s32.totalorder %s43, %s46
      %p55 = scmp.eq.s32.totalorder %s38, 1
      %p56 = por %p54, %p55
      %p57 = scmp.ne.s32.totalorder %s46, %s47
      %p58 = scmp.eq.s32.totalorder %s38, 0
      %p59 = por %p57, %p58
      %p60 = scmp.ne.s32.totalorder %s46, %s47
      %p61 = scmp.eq.s32.totalorder %s39, 1
      %p62 = por %p60, %p61
      %p64 = scmp.ne.s32.totalorder %s47, %s63
      %p65 = scmp.eq.s32.totalorder %s39, 0
      %p66 = por %p64, %p65
      %s67 = ssub.s32 %s33, %s40
      %p68 = scmp.eq.s32.totalorder %s67, 0
      %s70 = sadd.s32 %s69, 1
      %s71 = scalar_select %p68, %s69, %s70
      %p74 = pneg %p68
      %p75 = scmp.eq.s32.totalorder %s33, 1
      %p76 = por %p74, %p75
      %p77 = scmp.ne.s32.totalorder %s69, %s72
      %p78 = scmp.eq.s32.totalorder %s33, 0
      %p79 = por %p77, %p78
      %p80 = scmp.ne.s32.totalorder %s69, %s72
      %p81 = scmp.eq.s32.totalorder %s38, 1
      %p82 = por %p80, %p81
      %p83 = scmp.ne.s32.totalorder %s72, %s73
      %p84 = scmp.eq.s32.totalorder %s38, 0
      %p85 = por %p83, %p84
      %p86 = scmp.ne.s32.totalorder %s72, %s73
      %p87 = scmp.eq.s32.totalorder %s39, 1
      %p88 = por %p86, %p87
      %p90 = scmp.ne.s32.totalorder %s73, %s89
      %p91 = scmp.eq.s32.totalorder %s39, 0
      %p92 = por %p90, %p91
      %s93 = ssub.s32 %s33, %s40
      %p94 = scmp.eq.s32.totalorder %s93, 0
      %s96 = sadd.s32 %s95, 1
      %s97 = scalar_select %p94, %s95, %s96
      %p100 = pneg %p94
      %p101 = scmp.eq.s32.totalorder %s33, 1
      %p102 = por %p100, %p101
      %p103 = scmp.ne.s32.totalorder %s95, %s98
      %p104 = scmp.eq.s32.totalorder %s33, 0
      %p105 = por %p103, %p104
      %p106 = scmp.ne.s32.totalorder %s95, %s98
      %p107 = scmp.eq.s32.totalorder %s38, 1
      %p108 = por %p106, %p107
      %p109 = scmp.ne.s32.totalorder %s98, %s99
      %p110 = scmp.eq.s32.totalorder %s38, 0
      %p111 = por %p109, %p110
      %p112 = scmp.ne.s32.totalorder %s98, %s99
      %p113 = scmp.eq.s32.totalorder %s39, 1
      %p114 = por %p112, %p113
      %p116 = scmp.ne.s32.totalorder %s99, %s115
      %p117 = scmp.eq.s32.totalorder %s39, 0
      %p118 = por %p116, %p117
      %s120 = sadd.s32 %s119, 1
      %p123 = scmp.eq.s32.totalorder %s33, 1
      %p124 = scmp.ne.s32.totalorder %s119, %s121
      %p125 = scmp.eq.s32.totalorder %s33, 0
      %p126 = por %p124, %p125
      %p127 = scmp.ne.s32.totalorder %s119, %s121
      %p128 = scmp.eq.s32.totalorder %s38, 1
      %p129 = por %p127, %p128
      %p130 = scmp.ne.s32.totalorder %s121, %s122
      %p131 = scmp.eq.s32.totalorder %s38, 0
      %p132 = por %p130, %p131
      %p133 = scmp.ne.s32.totalorder %s121, %s122
      %p134 = scmp.eq.s32.totalorder %s39, 1
      %p135 = por %p133, %p134
      %p137 = scmp.ne.s32.totalorder %s122, %s136
      %p138 = scmp.eq.s32.totalorder %s39, 0
      %p139 = por %p137, %p138
      %s141 = sadd.s32 %s140, 1
      %p144 = scmp.eq.s32.totalorder %s33, 1
      %p145 = scmp.ne.s32.totalorder %s140, %s142
      %p146 = scmp.eq.s32.totalorder %s33, 0
      %p147 = por %p145, %p146
      %p148 = scmp.ne.s32.totalorder %s140, %s142
      %p149 = scmp.eq.s32.totalorder %s38, 1
      %p150 = por %p148, %p149
      %p151 = scmp.ne.s32.totalorder %s142, %s143
      %p152 = scmp.eq.s32.totalorder %s38, 0
      %p153 = por %p151, %p152
      %p154 = scmp.ne.s32.totalorder %s142, %s143
      %p155 = scmp.eq.s32.totalorder %s39, 1
      %p156 = por %p154, %p155
      %p158 = scmp.ne.s32.totalorder %s143, %s157
      %p159 = scmp.eq.s32.totalorder %s39, 0
      %p160 = por %p158, %p159
      %s162 = sadd.s32 %s161, 1
      %p165 = scmp.eq.s32.totalorder %s33, 1
      %p166 = scmp.ne.s32.totalorder %s161, %s163
      %p167 = scmp.eq.s32.totalorder %s33, 0
      %p168 = por %p166, %p167
      %p169 = scmp.ne.s32.totalorder %s161, %s163
      %p170 = scmp.eq.s32.totalorder %s38, 1
      %p171 = por %p169, %p170
      %p172 = scmp.ne.s32.totalorder %s163, %s164
      %p173 = scmp.eq.s32.totalorder %s38, 0
      %p174 = por %p172, %p173
      %p175 = scmp.ne.s32.totalorder %s163, %s164
      %p176 = scmp.eq.s32.totalorder %s39, 1
      %p177 = por %p175, %p176
      %p179 = scmp.ne.s32.totalorder %s164, %s178
      %p180 = scmp.eq.s32.totalorder %s39, 0
      %p181 = por %p179, %p180
      %s183 = sadd.s32 %s182, 1
      %p186 = scmp.eq.s32.totalorder %s33, 1
      %p187 = scmp.ne.s32.totalorder %s182, %s184
      %p188 = scmp.eq.s32.totalorder %s33, 0
      %p189 = por %p187, %p188
      %p190 = scmp.ne.s32.totalorder %s182, %s184
      %p191 = scmp.eq.s32.totalorder %s38, 1
      %p192 = por %p190, %p191
      %p193 = scmp.ne.s32.totalorder %s184, %s185
      %p194 = scmp.eq.s32.totalorder %s38, 0
      %p195 = por %p193, %p194
      %p196 = scmp.ne.s32.totalorder %s184, %s185
      %p197 = scmp.eq.s32.totalorder %s39, 1
      %p198 = por %p196, %p197
      %p200 = scmp.ne.s32.totalorder %s185, %s199
      %p201 = scmp.eq.s32.totalorder %s39, 0
      %p202 = por %p200, %p201
      %s204 = sadd.s32 %s203, 1
      %p207 = scmp.eq.s32.totalorder %s33, 1
      %p208 = scmp.ne.s32.totalorder %s203, %s205
      %p209 = scmp.eq.s32.totalorder %s33, 0
      %p210 = por %p208, %p209
      %p211 = scmp.ne.s32.totalorder %s203, %s205
      %p212 = scmp.eq.s32.totalorder %s38, 1
      %p213 = por %p211, %p212
      %p214 = scmp.ne.s32.totalorder %s205, %s206
      %p215 = scmp.eq.s32.totalorder %s38, 0
      %p216 = por %p214, %p215
      %p217 = scmp.ne.s32.totalorder %s205, %s206
      %p218 = scmp.eq.s32.totalorder %s39, 1
      %p219 = por %p217, %p218
      %p221 = scmp.ne.s32.totalorder %s206, %s220
      %p222 = scmp.eq.s32.totalorder %s39, 0
      %p223 = por %p221, %p222
      %s225 = sadd.s32 %s224, 1
      %p228 = scmp.eq.s32.totalorder %s33, 1
      %p229 = scmp.ne.s32.totalorder %s224, %s226
      %p230 = scmp.eq.s32.totalorder %s33, 0
      %p231 = por %p229, %p230
      %p232 = scmp.ne.s32.totalorder %s224, %s226
      %p233 = scmp.eq.s32.totalorder %s38, 1
      %p234 = por %p232, %p233
      %p235 = scmp.ne.s32.totalorder %s226, %s227
      %p236 = scmp.eq.s32.totalorder %s38, 0
      %p237 = por %p235, %p236
      %p238 = scmp.ne.s32.totalorder %s226, %s227
      %p239 = scmp.eq.s32.totalorder %s39, 1
      %p240 = por %p238, %p239
      %p242 = scmp.ne.s32.totalorder %s227, %s241
      %p243 = scmp.eq.s32.totalorder %s39, 0
      %p244 = por %p242, %p243
      %s246 = sadd.s32 %s245, 1
      %p249 = scmp.eq.s32.totalorder %s33, 1
      %p250 = scmp.ne.s32.totalorder %s245, %s247
      %p251 = scmp.eq.s32.totalorder %s33, 0
      %p252 = por %p250, %p251
      %p253 = scmp.ne.s32.totalorder %s245, %s247
      %p254 = scmp.eq.s32.totalorder %s38, 1
      %p255 = por %p253, %p254
      %p256 = scmp.ne.s32.totalorder %s247, %s248
      %p257 = scmp.eq.s32.totalorder %s38, 0
      %p258 = por %p256, %p257
      %p259 = scmp.ne.s32.totalorder %s247, %s248
      %p260 = scmp.eq.s32.totalorder %s39, 1
      %p261 = por %p259, %p260
      %p263 = scmp.ne.s32.totalorder %s248, %s262
      %p264 = scmp.eq.s32.totalorder %s39, 0
      %p265 = por %p263, %p264
      %s267 = sadd.s32 %s266, 1
      %p270 = scmp.eq.s32.totalorder %s33, 1
      %p271 = scmp.ne.s32.totalorder %s266, %s268
      %p272 = scmp.eq.s32.totalorder %s33, 0
      %p273 = por %p271, %p272
      %p274 = scmp.ne.s32.totalorder %s266, %s268
      %p275 = scmp.eq.s32.totalorder %s38, 1
      %p276 = por %p274, %p275
      %p277 = scmp.ne.s32.totalorder %s268, %s269
      %p278 = scmp.eq.s32.totalorder %s38, 0
      %p279 = por %p277, %p278
      %p280 = scmp.ne.s32.totalorder %s268, %s269
      %p281 = scmp.eq.s32.totalorder %s39, 1
      %p282 = por %p280, %p281
      %p284 = scmp.ne.s32.totalorder %s269, %s283
      %p285 = scmp.eq.s32.totalorder %s39, 0
      %p286 = por %p284, %p285
      %s287 = ssub.s32 %s33, %s40
      %p288 = scmp.eq.s32.totalorder %s287, 0
      %s290 = sadd.s32 %s289, 1
      %s291 = scalar_select %p288, %s289, %s290
      %p294 = pneg %p288
      %p295 = scmp.eq.s32.totalorder %s33, 1
      %p296 = por %p294, %p295
      %p297 = scmp.ne.s32.totalorder %s289, %s292
      %p298 = scmp.eq.s32.totalorder %s33, 0
      %p299 = por %p297, %p298
      %p300 = scmp.ne.s32.totalorder %s289, %s292
      %p301 = scmp.eq.s32.totalorder %s38, 1
      %p302 = por %p300, %p301
      %p303 = scmp.ne.s32.totalorder %s292, %s293
      %p304 = scmp.eq.s32.totalorder %s38, 0
      %p305 = por %p303, %p304
      %p306 = scmp.ne.s32.totalorder %s292, %s293
      %p307 = scmp.eq.s32.totalorder %s39, 1
      %p308 = por %p306, %p307
      %p310 = scmp.ne.s32.totalorder %s293, %s309
      %p311 = scmp.eq.s32.totalorder %s39, 0
      %p312 = por %p310, %p311
      %s313 = ssub.s32 %s33, %s40
      %p314 = scmp.eq.s32.totalorder %s313, 0
      %s316 = sadd.s32 %s315, 1
      %s317 = scalar_select %p314, %s315, %s316
      %p320 = pneg %p314
      %p321 = scmp.eq.s32.totalorder %s33, 1
      %p322 = por %p320, %p321
      %p323 = scmp.ne.s32.totalorder %s315, %s318
      %p324 = scmp.eq.s32.totalorder %s33, 0
      %p325 = por %p323, %p324
      %p326 = scmp.ne.s32.totalorder %s315, %s318
      %p327 = scmp.eq.s32.totalorder %s38, 1
      %p328 = por %p326, %p327
      %p329 = scmp.ne.s32.totalorder %s318, %s319
      %p330 = scmp.eq.s32.totalorder %s38, 0
      %p331 = por %p329, %p330
      %p332 = scmp.ne.s32.totalorder %s318, %s319
      %p333 = scmp.eq.s32.totalorder %s39, 1
      %p334 = por %p332, %p333
      %p336 = scmp.ne.s32.totalorder %s319, %s335
      %p337 = scmp.eq.s32.totalorder %s39, 0
      %p338 = por %p336, %p337
      %p339 = scmp.le.s32.totalorder 1, %s33
      %p340 = scmp.lt.s32.totalorder %s33, 3
      %p341 = pnand %p339, %p340
      %p342 = pneg %p341
      // Predicated region
      $region9: #{tpu_custom_call.1} parent=5 // pred_check
        _
      $region10: #{tpu_custom_call.1} parent=5 // pred_check_branch
        %344 = sbr.rel (%p341) target = $region12
      $region11: #{tpu_custom_call.1} parent=5 // pred_region
        %s345 = ssub.s32 %s33, 1
        // Predicated region
        $region13: #{tpu_custom_call.1} parent=11 // pred_check
          %p346 = pneg %p132
        $region14: #{tpu_custom_call.1} parent=11 // pred_check_branch
          %348 = sbr.rel (%p346) target = $region16
        $region15: #{tpu_custom_call.1} parent=11 // pred_region
          %350 = vsyncadd [#allocation10], 0
          %s351 = sshll.u32 %s3, 4
          %s352 = int_to_ptr.hbm [resolvable:$true] %s351
          %s353 = sshll.u32 [#allocation9], 4
          %s354 = int_to_ptr.vmem [resolvable:$true] %s353
          %359 = dma.hbm_to_vmem [thread:$0]  %s352, 512, %s354, [#allocation10], 128, 128, 8
        $region16: #{tpu_custom_call.1} parent=11 // pred_fallthru
          _
        // Predicated region
        $region17: #{tpu_custom_call.1} parent=11 // pred_check
          %p360 = pneg %p153
        $region18: #{tpu_custom_call.1} parent=11 // pred_check_branch
          %362 = sbr.rel (%p360) target = $region20
        $region19: #{tpu_custom_call.1} parent=11 // pred_region
          _
        $region20: #{tpu_custom_call.1} parent=11 // pred_fallthru
          _
        // Predicated region
        $region21: #{tpu_custom_call.1} parent=11 // pred_check
          %p363 = pneg %p174
        $region22: #{tpu_custom_call.1} parent=11 // pred_check_branch
          %365 = sbr.rel (%p363) target = $region24
        $region23: #{tpu_custom_call.1} parent=11 // pred_region
          %367 = vsyncadd [#allocation10], 0
          %s368 = sshll.u32 %s5, 4
          %s369 = int_to_ptr.hbm [resolvable:$true] %s368
          %s370 = sshll.u32 [#allocation11], 4
          %s371 = int_to_ptr.vmem [resolvable:$true] %s370
          %376 = dma.hbm_to_vmem [thread:$0]  %s369, 512, %s371, [#allocation10], 128, 128, 8
        $region24: #{tpu_custom_call.1} parent=11 // pred_fallthru
          _
        // Predicated region
        $region25: #{tpu_custom_call.1} parent=11 // pred_check
          %p377 = pneg %p195
        $region26: #{tpu_custom_call.1} parent=11 // pred_check_branch
          %379 = sbr.rel (%p377) target = $region28
        $region27: #{tpu_custom_call.1} parent=11 // pred_region
          _
        $region28: #{tpu_custom_call.1} parent=11 // pred_fallthru
          _
        // Predicated region
        $region29: #{tpu_custom_call.1} parent=11 // pred_check
          %p380 = pneg %p216
        $region30: #{tpu_custom_call.1} parent=11 // pred_check_branch
          %382 = sbr.rel (%p380) target = $region32
        $region31: #{tpu_custom_call.1} parent=11 // pred_region
          %384 = vsyncadd [#allocation13], 0
          %s385 = sshll.u32 %s7, 4
          %s386 = int_to_ptr.hbm [resolvable:$true] %s385
          %s387 = sshll.u32 [#allocation12], 4
          %s388 = int_to_ptr.vmem [resolvable:$true] %s387
          %393 = dma.hbm_to_vmem [thread:$0]  %s386, 512, %s388, [#allocation13], 128, 128, 8
        $region32: #{tpu_custom_call.1} parent=11 // pred_fallthru
          _
        // Predicated region
        $region33: #{tpu_custom_call.1} parent=11 // pred_check
          %p394 = pneg %p237
        $region34: #{tpu_custom_call.1} parent=11 // pred_check_branch
          %396 = sbr.rel (%p394) target = $region36
        $region35: #{tpu_custom_call.1} parent=11 // pred_region
          _
        $region36: #{tpu_custom_call.1} parent=11 // pred_fallthru
          _
        // Predicated region
        $region37: #{tpu_custom_call.1} parent=11 // pred_check
          %p397 = pneg %p258
        $region38: #{tpu_custom_call.1} parent=11 // pred_check_branch
          %399 = sbr.rel (%p397) target = $region40
        $region39: #{tpu_custom_call.1} parent=11 // pred_region
          %401 = vsyncadd [#allocation13], 0
          %s402 = sshll.u32 %s9, 4
          %s403 = int_to_ptr.hbm [resolvable:$true] %s402
          %s404 = sshll.u32 [#allocation14], 4
          %s405 = int_to_ptr.vmem [resolvable:$true] %s404
          %410 = dma.hbm_to_vmem [thread:$0]  %s403, 512, %s405, [#allocation13], 128, 128, 8
        $region40: #{tpu_custom_call.1} parent=11 // pred_fallthru
          _
        // Predicated region
        $region41: #{tpu_custom_call.1} parent=11 // pred_check
          %p411 = pneg %p279
        $region42: #{tpu_custom_call.1} parent=11 // pred_check_branch
          %413 = sbr.rel (%p411) target = $region44
        $region43: #{tpu_custom_call.1} parent=11 // pred_region
          _
        $region44: #{tpu_custom_call.1} parent=11 // pred_fallthru
          _
      $region12: #{tpu_custom_call.1} parent=5 // pred_fallthru
        _
      %p414 = scmp.lt.s32.totalorder %s33, 2
      // Predicated region
      $region45: #{tpu_custom_call.1} parent=5 // pred_check
        %p415 = pneg %p414
      $region46: #{tpu_custom_call.1} parent=5 // pred_check_branch
        %417 = sbr.rel (%p415) target = $region48
      $region47: #{tpu_custom_call.1} parent=5 // pred_region
        // Predicated region
        $region49: #{tpu_custom_call.1} parent=47 // pred_check
          %p418 = pneg %p53
        $region50: #{tpu_custom_call.1} parent=47 // pred_check_branch
          %420 = sbr.rel (%p418) target = $region52
        $region51: #{tpu_custom_call.1} parent=47 // pred_region
          %s421 = sand.u32 %s43, 1
          %s422 = scalar_lea.sflag [#allocation4], %s421
          %s423 = sand.u32 %s43, 1
          %s424 = smul.addr %s423, 8
          %s425 = scalar_lea.vmem [#allocation3], %s424
          %427 = vsyncadd %s422, 0
          %s428 = smul.addr %s33, 8
          %s429 = scalar_lea.hbm %s0, %s428
          %s431 = sshll.u32 %s429, 4
          %s432 = int_to_ptr.hbm [resolvable:$true] %s431
          %s433 = sshll.u32 %s425, 4
          %s434 = int_to_ptr.vmem [resolvable:$true] %s433
          %436 = dma.hbm_to_vmem [thread:$0]  %s432, 128, %s434, %s422
        $region52: #{tpu_custom_call.1} parent=47 // pred_fallthru
          _
        // Predicated region
        $region53: #{tpu_custom_call.1} parent=47 // pred_check
          %p437 = pneg %p79
        $region54: #{tpu_custom_call.1} parent=47 // pred_check_branch
          %439 = sbr.rel (%p437) target = $region56
        $region55: #{tpu_custom_call.1} parent=47 // pred_region
          %s440 = sand.u32 %s33, 1
          %s441 = scalar_lea.sflag [#allocation7], %s440
          %s442 = sand.u32 %s69, 1
          %s443 = smul.addr %s442, 8
          %s444 = scalar_lea.vmem [#allocation6], %s443
          %446 = vsyncadd %s441, 0
          %s447 = smul.addr %s33, 8
          %s448 = scalar_lea.hbm %s1, %s447
          %s450 = sshll.u32 %s448, 4
          %s451 = int_to_ptr.hbm [resolvable:$true] %s450
          %s452 = sshll.u32 %s444, 4
          %s453 = int_to_ptr.vmem [resolvable:$true] %s452
          %455 = dma.hbm_to_vmem [thread:$0]  %s451, 128, %s453, %s441
        $region56: #{tpu_custom_call.1} parent=47 // pred_fallthru
          _
        // Predicated region
        $region57: #{tpu_custom_call.1} parent=47 // pred_check
          %p456 = pneg %p105
        $region58: #{tpu_custom_call.1} parent=47 // pred_check_branch
          %458 = sbr.rel (%p456) target = $region60
        $region59: #{tpu_custom_call.1} parent=47 // pred_region
          %s459 = sand.u32 %s33, 1
          %s460 = scalar_lea.sflag [#allocation7], %s459
          %s461 = sand.u32 %s95, 1
          %s462 = smul.addr %s461, 8
          %s463 = scalar_lea.vmem [#allocation8], %s462
          %465 = vsyncadd %s460, 0
          %s466 = smul.addr %s33, 8
          %s467 = scalar_lea.hbm %s2, %s466
          %s469 = sshll.u32 %s467, 4
          %s470 = int_to_ptr.hbm [resolvable:$true] %s469
          %s471 = sshll.u32 %s463, 4
          %s472 = int_to_ptr.vmem [resolvable:$true] %s471
          %474 = dma.hbm_to_vmem [thread:$0]  %s470, 128, %s472, %s460
        $region60: #{tpu_custom_call.1} parent=47 // pred_fallthru
          _
      $region48: #{tpu_custom_call.1} parent=5 // pred_fallthru
        _
      %p475 = scmp.le.s32.totalorder 1, %s33
      %p476 = scmp.lt.s32.totalorder %s33, 3
      %p477 = pnand %p475, %p476
      %p478 = pneg %p477
      // Predicated region
      $region61: #{tpu_custom_call.1} parent=5 // pred_check
        _
      $region62: #{tpu_custom_call.1} parent=5 // pred_check_branch
        %480 = sbr.rel (%p477) target = $region64
      $region63: #{tpu_custom_call.1} parent=5 // pred_region
        %s481 = ssub.s32 %s33, 1
        %s482 = sand.u32 %s46, 1
        %s483 = scalar_lea.sflag [#allocation4], %s482
        %s484 = sand.u32 %s46, 1
        %s485 = smul.addr %s484, 8
        %s486 = scalar_lea.vmem [#allocation3], %s485
        // Predicated region
        $region65: #{tpu_custom_call.1} parent=63 // pred_check
          %p487 = pneg %p59
        $region66: #{tpu_custom_call.1} parent=63 // pred_check_branch
          %489 = sbr.rel (%p487) target = $region68
        $region67: #{tpu_custom_call.1} parent=63 // pred_region
          %491 = dma.done %s483, 128
        $region68: #{tpu_custom_call.1} parent=63 // pred_fallthru
          _
        %s492 = sand.u32 %s38, 1
        %s493 = scalar_lea.sflag [#allocation7], %s492
        %s494 = sand.u32 %s72, 1
        %s495 = smul.addr %s494, 8
        %s496 = scalar_lea.vmem [#allocation6], %s495
        // Predicated region
        $region69: #{tpu_custom_call.1} parent=63 // pred_check
          %p497 = pneg %p85
        $region70: #{tpu_custom_call.1} parent=63 // pred_check_branch
          %499 = sbr.rel (%p497) target = $region72
        $region71: #{tpu_custom_call.1} parent=63 // pred_region
          %501 = dma.done %s493, 128
        $region72: #{tpu_custom_call.1} parent=63 // pred_fallthru
          _
        %s502 = sand.u32 %s38, 1
        %s503 = scalar_lea.sflag [#allocation7], %s502
        %s504 = sand.u32 %s98, 1
        %s505 = smul.addr %s504, 8
        %s506 = scalar_lea.vmem [#allocation8], %s505
        // Predicated region
        $region73: #{tpu_custom_call.1} parent=63 // pred_check
          %p507 = pneg %p111
        $region74: #{tpu_custom_call.1} parent=63 // pred_check_branch
          %509 = sbr.rel (%p507) target = $region76
        $region75: #{tpu_custom_call.1} parent=63 // pred_region
          %511 = dma.done %s503, 128
        $region76: #{tpu_custom_call.1} parent=63 // pred_fallthru
          _
        // Predicated region
        $region77: #{tpu_custom_call.1} parent=63 // pred_check
          %p512 = pneg %p132
        $region78: #{tpu_custom_call.1} parent=63 // pred_check_branch
          %514 = sbr.rel (%p512) target = $region80
        $region79: #{tpu_custom_call.1} parent=63 // pred_region
          %516 = dma.done [#allocation10], 512
        $region80: #{tpu_custom_call.1} parent=63 // pred_fallthru
          _
        // Predicated region
        $region81: #{tpu_custom_call.1} parent=63 // pred_check
          %p517 = pneg %p174
        $region82: #{tpu_custom_call.1} parent=63 // pred_check_branch
          %519 = sbr.rel (%p517) target = $region84
        $region83: #{tpu_custom_call.1} parent=63 // pred_region
          %521 = dma.done [#allocation10], 512
        $region84: #{tpu_custom_call.1} parent=63 // pred_fallthru
          _
        // Predicated region
        $region85: #{tpu_custom_call.1} parent=63 // pred_check
          %p522 = pneg %p216
        $region86: #{tpu_custom_call.1} parent=63 // pred_check_branch
          %524 = sbr.rel (%p522) target = $region88
        $region87: #{tpu_custom_call.1} parent=63 // pred_region
          %526 = dma.done [#allocation13], 512
        $region88: #{tpu_custom_call.1} parent=63 // pred_fallthru
          _
        // Predicated region
        $region89: #{tpu_custom_call.1} parent=63 // pred_check
          %p527 = pneg %p258
        $region90: #{tpu_custom_call.1} parent=63 // pred_check_branch
          %529 = sbr.rel (%p527) target = $region92
        $region91: #{tpu_custom_call.1} parent=63 // pred_region
          %531 = dma.done [#allocation13], 512
        $region92: #{tpu_custom_call.1} parent=63 // pred_fallthru
          _
        %s532 = sand.u32 %s46, 1
        %s533 = scalar_lea.sflag [#allocation4], %s532
        %s534 = sand.u32 %s46, 1
        %s535 = smul.addr %s534, 8
        %s536 = scalar_lea.vmem [#allocation3], %s535
        %p537 = pneg %p59
        %p538 = pneg %p56
        %s539 = sand.u32 %s38, 1
        %s540 = scalar_lea.sflag [#allocation7], %s539
        %s541 = sand.u32 %s72, 1
        %s542 = smul.addr %s541, 8
        %s543 = scalar_lea.vmem [#allocation6], %s542
        %p544 = pneg %p85
        %p545 = pneg %p82
        %s546 = sand.u32 %s38, 1
        %s547 = scalar_lea.sflag [#allocation7], %s546
        %s548 = sand.u32 %s98, 1
        %s549 = smul.addr %s548, 8
        %s550 = scalar_lea.vmem [#allocation8], %s549
        %p551 = pneg %p111
        %p552 = pneg %p108
        %p553 = pneg %p132
        %p554 = pneg %p129
        %p555 = pneg %p153
        %p556 = pneg %p150
        %p557 = pneg %p174
        %p558 = pneg %p171
        %p559 = pneg %p195
        %p560 = pneg %p192
        %p561 = pneg %p216
        %p562 = pneg %p213
        %p563 = pneg %p237
        %p564 = pneg %p234
        %p565 = pneg %p258
        %p566 = pneg %p255
        %p567 = pneg %p279
        %p568 = pneg %p276
        %p569 = pneg %p305
        %p570 = pneg %p302
        %s571 = sand.u32 %s292, 1
        %s572 = scalar_lea.sflag [#allocation5], %s571
        %s573 = sand.u32 %s292, 1
        %s574 = smul.addr %s573, 8
        %s575 = scalar_lea.vmem [#allocation15], %s574
        %p576 = pneg %p331
        %p577 = pneg %p328
        %s578 = sand.u32 %s318, 1
        %s579 = scalar_lea.sflag [#allocation17], %s578
        %s580 = sand.u32 %s318, 1
        %s581 = smul.addr %s580, 32
        %s582 = scalar_lea.vmem [#allocation16], %s581
        %v583 = vld [vmem:[%s486] sm:$0xff]
        %v584 = vld [vmem:[%s496] sm:$0xff]
        %v585 = vld [vmem:[%s506] sm:$0xff]
        %v586 = vld [vmem:[#allocation9] sm:$0xff]
        %v587 = vld [vmem:[#allocation9 + $0x8] sm:$0xff]
        %v588 = vld [vmem:[#allocation9 + $0x10] sm:$0xff]
        %v589 = vld [vmem:[#allocation9 + $0x18] sm:$0xff]
        %v590 = vld [vmem:[%s4] sm:$0x1]
        %v592 = vperm.slane %v590, 0
        %vm594 = vcmask 261120
        %v596 = vsel %vm594, %v583, 0
        %598 = vmatpush.msra.mxu0 0.0
        %599 = vmatpush.msra.mxu0 0.0
        %600 = vmatpush.msra.mxu0 0.0
        %601 = vmatpush.msra.mxu0 0.0
        %602 = vmatpush.msra.mxu0 0.0
        %603 = vmatpush.msra.mxu0 0.0
        %604 = vmatpush.msra.mxu0 0.0
        %605 = vmatpush.msra.mxu0 0.0
        %606 = vmatpush.msra.mxu0 0.0
        %607 = vmatpush.msra.mxu0 0.0
        %608 = vmatpush.msra.mxu0 0.0
        %609 = vmatpush.msra.mxu0 0.0
        %610 = vmatpush.msra.mxu0 %v589
        %611 = vmatpush.msra.mxu0 %v588
        %612 = vmatpush.msra.mxu0 %v587
        %613 = vmatpush.msra.mxu0 %v586
        %614 = vmatmul.f32.gmra.mxu0 %v596
        %v615 = vpop.f32.mrf.mxu0
        %v616 = vadd.f32 %v592, %v615
        %617 = vdwg.mxu0
        %v618 = vld [vmem:[#allocation11] sm:$0xff]
        %v619 = vld [vmem:[#allocation11 + $0x8] sm:$0xff]
        %v620 = vld [vmem:[#allocation11 + $0x10] sm:$0xff]
        %v621 = vld [vmem:[#allocation11 + $0x18] sm:$0xff]
        %v622 = vld [vmem:[%s6] sm:$0x1]
        %v624 = vperm.slane %v622, 0
        %v627 = vsel %vm594, %v584, 0
        %629 = vmatpush.msra.mxu0 0.0
        %630 = vmatpush.msra.mxu0 0.0
        %631 = vmatpush.msra.mxu0 0.0
        %632 = vmatpush.msra.mxu0 0.0
        %633 = vmatpush.msra.mxu0 0.0
        %634 = vmatpush.msra.mxu0 0.0
        %635 = vmatpush.msra.mxu0 0.0
        %636 = vmatpush.msra.mxu0 0.0
        %637 = vmatpush.msra.mxu0 0.0
        %638 = vmatpush.msra.mxu0 0.0
        %639 = vmatpush.msra.mxu0 0.0
        %640 = vmatpush.msra.mxu0 0.0
        %641 = vmatpush.msra.mxu0 %v621
        %642 = vmatpush.msra.mxu0 %v620
        %643 = vmatpush.msra.mxu0 %v619
        %644 = vmatpush.msra.mxu0 %v618
        %645 = vmatmul.f32.gmra.mxu0 %v627
        %v646 = vpop.f32.mrf.mxu0
        %v647 = vadd.f32 %v624, %v646
        %648 = vdwg.mxu0
        %v649 = vld [vmem:[#allocation12] sm:$0xff]
        %v650 = vld [vmem:[#allocation12 + $0x8] sm:$0xff]
        %v651 = vld [vmem:[#allocation12 + $0x10] sm:$0xff]
        %v652 = vld [vmem:[#allocation12 + $0x18] sm:$0xff]
        %v653 = vld [vmem:[%s8] sm:$0x1]
        %v655 = vperm.slane %v653, 0
        %v658 = vsel %vm594, %v585, 0
        %660 = vmatpush.msra.mxu0 0.0
        %661 = vmatpush.msra.mxu0 0.0
        %662 = vmatpush.msra.mxu0 0.0
        %663 = vmatpush.msra.mxu0 0.0
        %664 = vmatpush.msra.mxu0 0.0
        %665 = vmatpush.msra.mxu0 0.0
        %666 = vmatpush.msra.mxu0 0.0
        %667 = vmatpush.msra.mxu0 0.0
        %668 = vmatpush.msra.mxu0 0.0
        %669 = vmatpush.msra.mxu0 0.0
        %670 = vmatpush.msra.mxu0 0.0
        %671 = vmatpush.msra.mxu0 0.0
        %672 = vmatpush.msra.mxu0 %v652
        %673 = vmatpush.msra.mxu0 %v651
        %674 = vmatpush.msra.mxu0 %v650
        %675 = vmatpush.msra.mxu0 %v649
        %676 = vmatmul.f32.gmra.mxu0 %v658
        %v677 = vpop.f32.mrf.mxu0
        %v678 = vadd.f32 %v655, %v677
        %679 = vdwg.mxu0
        %vm680 = vcmask 64512
        %v682 = vsel %vm680, %v616, 0
        %v685 = vsel %vm680, %v647, 0
        %687 = vmatpush.xpose.msra.mxu0 0.0
        %688 = vmatpush.xpose.msra.mxu0 0.0
        %689 = vmatpush.xpose.msra.mxu0 0.0
        %690 = vmatpush.xpose.msra.mxu0 0.0
        %691 = vmatpush.xpose.msra.mxu0 0.0
        %692 = vmatpush.xpose.msra.mxu0 0.0
        %693 = vmatpush.xpose.msra.mxu0 0.0
        %694 = vmatpush.xpose.msra.mxu0 0.0
        %695 = vmatpush.xpose.msra.mxu0 0.0
        %696 = vmatpush.xpose.msra.mxu0 0.0
        %697 = vmatpush.xpose.msra.mxu0 0.0
        %698 = vmatpush.xpose.msra.mxu0 0.0
        %699 = vmatpush.xpose.msra.mxu0 0.0
        %700 = vmatpush.xpose.msra.mxu0 0.0
        %701 = vmatpush.xpose.msra.mxu0 0.0
        %702 = vmatpush.xpose.msra.mxu0 %v685
        %703 = vmatmul.f32.gmra.mxu0 %v682
        %v704 = vpop.f32.mrf.mxu0
        %v705 = vadd.f32 0.0, %v704
        %706 = vdwg.mxu0
        %v707 = vmul.f32 %v705, 0.35355338
        %v708 = vsel %vm680, %v707, -inf
        %709 = vmax.xlane.f32.xlu0 %v708
        %v710 = vpop.xlane.xlu0 %709
        %v711 = vsub.f32 %v707, %v710
        %v712 = vmul.f32 %v711, 1.442695
        %v713 = vpow.pop %v712
        %v714 = vsel %vm680, %v713, 0.0
        %715 = vadd.xlane.f32.xlu0 %v714
        %v716 = vpop.xlane.xlu0 %715
        %v717 = vrcp.pop %v716
        %v718 = vmul.f32 %v716, %v717
        %v719 = vsub.f32 1.0, %v718
        %v720 = vmul.f32 %v717, %v719
        %v721 = vadd.f32 %v717, %v720
        %vm722 = vweird.f32 %v716
        %vm723 = vweird.f32 %v717
        %vm724 = vmor %vm722, %vm723
        %v725 = vsel %vm724, %v717, %v721
        %v726 = vand.u32 2147483647, %v716
        %vm727 = vcmp.eq.f32.partialorder %v726, 8.507059e+37
        %v728 = vand.u32 %v716, 2147483648
        %v729 = vor.u32 1.1754944e-38, %v728
        %v730 = vsel %vm727, %v729, %v725
        %v731 = vmul.f32 %v713, %v730
        %732 = vst.msk [vmem:[%s582] sm:$0xff] %vm680, %v731
        %v734 = vsel %vm680, %v731, 0
        %736 = vmatpush.msra.mxu0 0.0
        %737 = vmatpush.msra.mxu0 0.0
        %738 = vmatpush.msra.mxu0 0.0
        %739 = vmatpush.msra.mxu0 0.0
        %740 = vmatpush.msra.mxu0 0.0
        %741 = vmatpush.msra.mxu0 0.0
        %742 = vmatpush.msra.mxu0 0.0
        %743 = vmatpush.msra.mxu0 0.0
        %744 = vmatpush.msra.mxu0 0.0
        %745 = vmatpush.msra.mxu0 0.0
        %746 = vmatpush.msra.mxu0 0.0
        %747 = vmatpush.msra.mxu0 0.0
        %748 = vmatpush.msra.mxu0 0.0
        %749 = vmatpush.msra.mxu0 0.0
        %750 = vmatpush.msra.mxu0 0.0
        %751 = vmatpush.msra.mxu0 %v678
        %752 = vmatmul.f32.gmra.mxu0 %v734
        %v753 = vpop.f32.mrf.mxu0
        %v754 = vadd.f32 0.0, %v753
        %755 = vdwg.mxu0
        %756 = vst.msk [vmem:[#allocation2] sm:$0xff] %vm680, %v754
        %757 = vrot.lane.b32.xlu0 %v616, 120
        %v758 = vpop.permute.xlu0 %757
        %759 = vrot.lane.b32.xlu0 %v647, 120
        %v760 = vpop.permute.xlu0 %759
        %v761 = vsel %vm680, %v758, 0
        %v763 = vsel %vm680, %v760, 0
        %765 = vmatpush.xpose.msra.mxu0 0.0
        %766 = vmatpush.xpose.msra.mxu0 0.0
        %767 = vmatpush.xpose.msra.mxu0 0.0
        %768 = vmatpush.xpose.msra.mxu0 0.0
        %769 = vmatpush.xpose.msra.mxu0 0.0
        %770 = vmatpush.xpose.msra.mxu0 0.0
        %771 = vmatpush.xpose.msra.mxu0 0.0
        %772 = vmatpush.xpose.msra.mxu0 0.0
        %773 = vmatpush.xpose.msra.mxu0 0.0
        %774 = vmatpush.xpose.msra.mxu0 0.0
        %775 = vmatpush.xpose.msra.mxu0 0.0
        %776 = vmatpush.xpose.msra.mxu0 0.0
        %777 = vmatpush.xpose.msra.mxu0 0.0
        %778 = vmatpush.xpose.msra.mxu0 0.0
        %779 = vmatpush.xpose.msra.mxu0 0.0
        %780 = vmatpush.xpose.msra.mxu0 %v763
        %781 = vmatmul.f32.gmra.mxu0 %v761
        %v782 = vpop.f32.mrf.mxu0
        %v783 = vadd.f32 0.0, %v782
        %784 = vdwg.mxu0
        %v785 = vmul.f32 %v783, 0.35355338
        %v786 = vsel %vm680, %v785, -inf
        %787 = vmax.xlane.f32.xlu0 %v786
        %v788 = vpop.xlane.xlu0 %787
        %v789 = vsub.f32 %v785, %v788
        %v790 = vmul.f32 %v789, 1.442695
        %v791 = vpow.pop %v790
        %v792 = vsel %vm680, %v791, 0.0
        %793 = vadd.xlane.f32.xlu0 %v792
        %v794 = vpop.xlane.xlu0 %793
        %v795 = vrcp.pop %v794
        %v796 = vmul.f32 %v794, %v795
        %v797 = vsub.f32 1.0, %v796
        %v798 = vmul.f32 %v795, %v797
        %v799 = vadd.f32 %v795, %v798
        %vm800 = vweird.f32 %v794
        %vm801 = vweird.f32 %v795
        %vm802 = vmor %vm800, %vm801
        %v803 = vsel %vm802, %v795, %v799
        %v804 = vand.u32 2147483647, %v794
        %vm805 = vcmp.eq.f32.partialorder %v804, 8.507059e+37
        %v806 = vand.u32 %v794, 2147483648
        %v807 = vor.u32 1.1754944e-38, %v806
        %v808 = vsel %vm805, %v807, %v803
        %v809 = vmul.f32 %v791, %v808
        %s810 = scalar_lea.vmem %s582, 8 [#allocation16]
        %811 = vst.msk [vmem:[%s810] sm:$0xff] %vm680, %v809
        %813 = vrot.lane.b32.xlu0 %v678, 120
        %v814 = vpop.permute.xlu0 %813
        %v817 = vsel %vm680, %v809, 0
        %819 = vmatpush.msra.mxu0 0.0
        %820 = vmatpush.msra.mxu0 0.0
        %821 = vmatpush.msra.mxu0 0.0
        %822 = vmatpush.msra.mxu0 0.0
        %823 = vmatpush.msra.mxu0 0.0
        %824 = vmatpush.msra.mxu0 0.0
        %825 = vmatpush.msra.mxu0 0.0
        %826 = vmatpush.msra.mxu0 0.0
        %827 = vmatpush.msra.mxu0 0.0
        %828 = vmatpush.msra.mxu0 0.0
        %829 = vmatpush.msra.mxu0 0.0
        %830 = vmatpush.msra.mxu0 0.0
        %831 = vmatpush.msra.mxu0 0.0
        %832 = vmatpush.msra.mxu0 0.0
        %833 = vmatpush.msra.mxu0 0.0
        %834 = vmatpush.msra.mxu0 %v814
        %835 = vmatmul.f32.gmra.mxu0 %v817
        %v836 = vpop.f32.mrf.mxu0
        %v837 = vadd.f32 0.0, %v836
        %838 = vdwg.mxu0
        %840 = vrot.lane.b32.xlu0 %v837, 8
        %v841 = vpop.permute.xlu0 %840
        %vm843 = vcmask 130112
        %844 = vst.msk [vmem:[#allocation2] sm:$0xff] %vm843, %v841
        %845 = vrot.lane.b32.xlu0 %v616, 112
        %v846 = vpop.permute.xlu0 %845
        %847 = vrot.lane.b32.xlu0 %v647, 112
        %v848 = vpop.permute.xlu0 %847
        %v849 = vsel %vm680, %v846, 0
        %v851 = vsel %vm680, %v848, 0
        %853 = vmatpush.xpose.msra.mxu0 0.0
        %854 = vmatpush.xpose.msra.mxu0 0.0
        %855 = vmatpush.xpose.msra.mxu0 0.0
        %856 = vmatpush.xpose.msra.mxu0 0.0
        %857 = vmatpush.xpose.msra.mxu0 0.0
        %858 = vmatpush.xpose.msra.mxu0 0.0
        %859 = vmatpush.xpose.msra.mxu0 0.0
        %860 = vmatpush.xpose.msra.mxu0 0.0
        %861 = vmatpush.xpose.msra.mxu0 0.0
        %862 = vmatpush.xpose.msra.mxu0 0.0
        %863 = vmatpush.xpose.msra.mxu0 0.0
        %864 = vmatpush.xpose.msra.mxu0 0.0
        %865 = vmatpush.xpose.msra.mxu0 0.0
        %866 = vmatpush.xpose.msra.mxu0 0.0
        %867 = vmatpush.xpose.msra.mxu0 0.0
        %868 = vmatpush.xpose.msra.mxu0 %v851
        %869 = vmatmul.f32.gmra.mxu0 %v849
        %v870 = vpop.f32.mrf.mxu0
        %v871 = vadd.f32 0.0, %v870
        %872 = vdwg.mxu0
        %v873 = vmul.f32 %v871, 0.35355338
        %v874 = vsel %vm680, %v873, -inf
        %875 = vmax.xlane.f32.xlu0 %v874
        %v876 = vpop.xlane.xlu0 %875
        %v877 = vsub.f32 %v873, %v876
        %v878 = vmul.f32 %v877, 1.442695
        %v879 = vpow.pop %v878
        %v880 = vsel %vm680, %v879, 0.0
        %881 = vadd.xlane.f32.xlu0 %v880
        %v882 = vpop.xlane.xlu0 %881
        %v883 = vrcp.pop %v882
        %v884 = vmul.f32 %v882, %v883
        %v885 = vsub.f32 1.0, %v884
        %v886 = vmul.f32 %v883, %v885
        %v887 = vadd.f32 %v883, %v886
        %vm888 = vweird.f32 %v882
        %vm889 = vweird.f32 %v883
        %vm890 = vmor %vm888, %vm889
        %v891 = vsel %vm890, %v883, %v887
        %v892 = vand.u32 2147483647, %v882
        %vm893 = vcmp.eq.f32.partialorder %v892, 8.507059e+37
        %v894 = vand.u32 %v882, 2147483648
        %v895 = vor.u32 1.1754944e-38, %v894
        %v896 = vsel %vm893, %v895, %v891
        %v897 = vmul.f32 %v879, %v896
        %s898 = scalar_lea.vmem %s582, 16 [#allocation16]
        %899 = vst.msk [vmem:[%s898] sm:$0xff] %vm680, %v897
        %900 = vrot.lane.b32.xlu0 %v678, 112
        %v901 = vpop.permute.xlu0 %900
        %v904 = vsel %vm680, %v897, 0
        %906 = vmatpush.msra.mxu0 0.0
        %907 = vmatpush.msra.mxu0 0.0
        %908 = vmatpush.msra.mxu0 0.0
        %909 = vmatpush.msra.mxu0 0.0
        %910 = vmatpush.msra.mxu0 0.0
        %911 = vmatpush.msra.mxu0 0.0
        %912 = vmatpush.msra.mxu0 0.0
        %913 = vmatpush.msra.mxu0 0.0
        %914 = vmatpush.msra.mxu0 0.0
        %915 = vmatpush.msra.mxu0 0.0
        %916 = vmatpush.msra.mxu0 0.0
        %917 = vmatpush.msra.mxu0 0.0
        %918 = vmatpush.msra.mxu0 0.0
        %919 = vmatpush.msra.mxu0 0.0
        %920 = vmatpush.msra.mxu0 0.0
        %921 = vmatpush.msra.mxu0 %v901
        %922 = vmatmul.f32.gmra.mxu0 %v904
        %v923 = vpop.f32.mrf.mxu0
        %v924 = vadd.f32 0.0, %v923
        %925 = vdwg.mxu0
        %927 = vrot.lane.b32.xlu0 %v924, 16
        %v928 = vpop.permute.xlu0 %927
        %vm930 = vcmask 195712
        %931 = vst.msk [vmem:[#allocation2] sm:$0xff] %vm930, %v928
        %932 = vrot.lane.b32.xlu0 %v616, 104
        %v933 = vpop.permute.xlu0 %932
        %934 = vrot.lane.b32.xlu0 %v647, 104
        %v935 = vpop.permute.xlu0 %934
        %v936 = vsel %vm680, %v933, 0
        %v938 = vsel %vm680, %v935, 0
        %940 = vmatpush.xpose.msra.mxu0 0.0
        %941 = vmatpush.xpose.msra.mxu0 0.0
        %942 = vmatpush.xpose.msra.mxu0 0.0
        %943 = vmatpush.xpose.msra.mxu0 0.0
        %944 = vmatpush.xpose.msra.mxu0 0.0
        %945 = vmatpush.xpose.msra.mxu0 0.0
        %946 = vmatpush.xpose.msra.mxu0 0.0
        %947 = vmatpush.xpose.msra.mxu0 0.0
        %948 = vmatpush.xpose.msra.mxu0 0.0
        %949 = vmatpush.xpose.msra.mxu0 0.0
        %950 = vmatpush.xpose.msra.mxu0 0.0
        %951 = vmatpush.xpose.msra.mxu0 0.0
        %952 = vmatpush.xpose.msra.mxu0 0.0
        %953 = vmatpush.xpose.msra.mxu0 0.0
        %954 = vmatpush.xpose.msra.mxu0 0.0
        %955 = vmatpush.xpose.msra.mxu0 %v938
        %956 = vmatmul.f32.gmra.mxu0 %v936
        %v957 = vpop.f32.mrf.mxu0
        %v958 = vadd.f32 0.0, %v957
        %959 = vdwg.mxu0
        %v960 = vmul.f32 %v958, 0.35355338
        %v961 = vsel %vm680, %v960, -inf
        %962 = vmax.xlane.f32.xlu0 %v961
        %v963 = vpop.xlane.xlu0 %962
        %v964 = vsub.f32 %v960, %v963
        %v965 = vmul.f32 %v964, 1.442695
        %v966 = vpow.pop %v965
        %v967 = vsel %vm680, %v966, 0.0
        %968 = vadd.xlane.f32.xlu0 %v967
        %v969 = vpop.xlane.xlu0 %968
        %v970 = vrcp.pop %v969
        %v971 = vmul.f32 %v969, %v970
        %v972 = vsub.f32 1.0, %v971
        %v973 = vmul.f32 %v970, %v972
        %v974 = vadd.f32 %v970, %v973
        %vm975 = vweird.f32 %v969
        %vm976 = vweird.f32 %v970
        %vm977 = vmor %vm975, %vm976
        %v978 = vsel %vm977, %v970, %v974
        %v979 = vand.u32 2147483647, %v969
        %vm980 = vcmp.eq.f32.partialorder %v979, 8.507059e+37
        %v981 = vand.u32 %v969, 2147483648
        %v982 = vor.u32 1.1754944e-38, %v981
        %v983 = vsel %vm980, %v982, %v978
        %v984 = vmul.f32 %v966, %v983
        %s985 = scalar_lea.vmem %s582, 24 [#allocation16]
        %986 = vst.msk [vmem:[%s985] sm:$0xff] %vm680, %v984
        %987 = vrot.lane.b32.xlu0 %v678, 104
        %v988 = vpop.permute.xlu0 %987
        %v991 = vsel %vm680, %v984, 0
        %993 = vmatpush.msra.mxu0 0.0
        %994 = vmatpush.msra.mxu0 0.0
        %995 = vmatpush.msra.mxu0 0.0
        %996 = vmatpush.msra.mxu0 0.0
        %997 = vmatpush.msra.mxu0 0.0
        %998 = vmatpush.msra.mxu0 0.0
        %999 = vmatpush.msra.mxu0 0.0
        %1000 = vmatpush.msra.mxu0 0.0
        %1001 = vmatpush.msra.mxu0 0.0
        %1002 = vmatpush.msra.mxu0 0.0
        %1003 = vmatpush.msra.mxu0 0.0
        %1004 = vmatpush.msra.mxu0 0.0
        %1005 = vmatpush.msra.mxu0 0.0
        %1006 = vmatpush.msra.mxu0 0.0
        %1007 = vmatpush.msra.mxu0 0.0
        %1008 = vmatpush.msra.mxu0 %v988
        %1009 = vmatmul.f32.gmra.mxu0 %v991
        %v1010 = vpop.f32.mrf.mxu0
        %v1011 = vadd.f32 0.0, %v1010
        %1012 = vdwg.mxu0
        %1014 = vrot.lane.b32.xlu0 %v1011, 24
        %v1015 = vpop.permute.xlu0 %1014
        %vm1017 = vcmask 261312
        %1018 = vst.msk [vmem:[#allocation2] sm:$0xff] %vm1017, %v1015
        %v1019 = vld [vmem:[#allocation2] sm:$0xff]
        %v1020 = vld [vmem:[#allocation14] sm:$0xff]
        %v1021 = vld [vmem:[#allocation14 + $0x8] sm:$0xff]
        %v1022 = vld [vmem:[#allocation14 + $0x10] sm:$0xff]
        %v1023 = vld [vmem:[#allocation14 + $0x18] sm:$0xff]
        %v1024 = vld [vmem:[%s10] sm:$0x1]
        %v1026 = vperm.slane %v1024, 0
        %v1029 = vsel %vm594, %v1019, 0
        %1031 = vmatpush.msra.mxu0 0.0
        %1032 = vmatpush.msra.mxu0 0.0
        %1033 = vmatpush.msra.mxu0 0.0
        %1034 = vmatpush.msra.mxu0 0.0
        %1035 = vmatpush.msra.mxu0 0.0
        %1036 = vmatpush.msra.mxu0 0.0
        %1037 = vmatpush.msra.mxu0 0.0
        %1038 = vmatpush.msra.mxu0 0.0
        %1039 = vmatpush.msra.mxu0 0.0
        %1040 = vmatpush.msra.mxu0 0.0
        %1041 = vmatpush.msra.mxu0 0.0
        %1042 = vmatpush.msra.mxu0 0.0
        %1043 = vmatpush.msra.mxu0 %v1023
        %1044 = vmatpush.msra.mxu0 %v1022
        %1045 = vmatpush.msra.mxu0 %v1021
        %1046 = vmatpush.msra.mxu0 %v1020
        %1047 = vmatmul.f32.gmra.mxu0 %v1029
        %v1048 = vpop.f32.mrf.mxu0
        %v1049 = vadd.f32 %v1026, %v1048
        %1050 = vdwg.mxu0
        %1051 = vst.msk [vmem:[%s575] sm:$0xff] %vm594, %v1049
        %s1052 = sand.u32 %s292, 1
        %s1053 = scalar_lea.sflag [#allocation5], %s1052
        %s1054 = sand.u32 %s292, 1
        %s1055 = smul.addr %s1054, 8
        %s1056 = scalar_lea.vmem [#allocation15], %s1055
        %s1057 = sand.u32 %s318, 1
        %s1058 = scalar_lea.sflag [#allocation17], %s1057
        %s1059 = sand.u32 %s318, 1
        %s1060 = smul.addr %s1059, 32
        %s1061 = scalar_lea.vmem [#allocation16], %s1060
        // Predicated region
        $region93: #{tpu_custom_call.1} parent=63 // pred_check
          %p1062 = pneg %p302
        $region94: #{tpu_custom_call.1} parent=63 // pred_check_branch
          %1064 = sbr.rel (%p1062) target = $region96
        $region95: #{tpu_custom_call.1} parent=63 // pred_region
          %1066 = vsyncadd %s1053, 0
          %s1067 = smul.addr %s38, 8
          %s1068 = scalar_lea.hbm %s11, %s1067
          %s1070 = sshll.u32 %s1056, 4
          %s1071 = int_to_ptr.vmem [resolvable:$true] %s1070
          %s1072 = sshll.u32 %s1068, 4
          %s1073 = int_to_ptr.hbm [resolvable:$true] %s1072
          %1075 = dma.vmem_to_hbm [thread:$0]  %s1071, 128, %s1073, %s1053
        $region96: #{tpu_custom_call.1} parent=63 // pred_fallthru
          _
        // Predicated region
        $region97: #{tpu_custom_call.1} parent=63 // pred_check
          %p1076 = pneg %p328
        $region98: #{tpu_custom_call.1} parent=63 // pred_check_branch
          %1078 = sbr.rel (%p1076) target = $region100
        $region99: #{tpu_custom_call.1} parent=63 // pred_region
          %1080 = vsyncadd %s1058, 0
          %s1081 = smul.addr %s38, 4
          %s1082 = smul.addr %s1081, 8
          %s1083 = scalar_lea.hbm %s12, %s1082
          %s1084 = sshll.u32 %s1061, 4
          %s1085 = int_to_ptr.vmem [resolvable:$true] %s1084
          %s1086 = sshll.u32 %s1083, 4
          %s1087 = int_to_ptr.hbm [resolvable:$true] %s1086
          %1092 = dma.vmem_to_hbm [thread:$0]  %s1085, 512, %s1087, %s1058, 128, 128, 8
        $region100: #{tpu_custom_call.1} parent=63 // pred_fallthru
          _
      $region64: #{tpu_custom_call.1} parent=5 // pred_fallthru
        _
      %p1093 = scmp.le.s32.totalorder 2, %s33
      // Predicated region
      $region101: #{tpu_custom_call.1} parent=5 // pred_check
        %p1094 = pneg %p1093
      $region102: #{tpu_custom_call.1} parent=5 // pred_check_branch
        %1096 = sbr.rel (%p1094) target = $region104
      $region103: #{tpu_custom_call.1} parent=5 // pred_region
        %s1097 = ssub.s32 %s33, 2
        // Predicated region
        $region105: #{tpu_custom_call.1} parent=103 // pred_check
          %p1098 = pneg %p308
        $region106: #{tpu_custom_call.1} parent=103 // pred_check_branch
          %1100 = sbr.rel (%p1098) target = $region108
        $region107: #{tpu_custom_call.1} parent=103 // pred_region
          %s1101 = sand.u32 %s293, 1
          %s1102 = scalar_lea.sflag [#allocation5], %s1101
          %s1103 = sand.u32 %s293, 1
          %s1104 = smul.addr %s1103, 8
          %s1105 = scalar_lea.vmem [#allocation15], %s1104
          %1107 = dma.done %s1102, 128
        $region108: #{tpu_custom_call.1} parent=103 // pred_fallthru
          _
        // Predicated region
        $region109: #{tpu_custom_call.1} parent=103 // pred_check
          %p1108 = pneg %p334
        $region110: #{tpu_custom_call.1} parent=103 // pred_check_branch
          %1110 = sbr.rel (%p1108) target = $region112
        $region111: #{tpu_custom_call.1} parent=103 // pred_region
          %s1111 = sand.u32 %s319, 1
          %s1112 = scalar_lea.sflag [#allocation17], %s1111
          %s1113 = sand.u32 %s319, 1
          %s1114 = smul.addr %s1113, 32
          %s1115 = scalar_lea.vmem [#allocation16], %s1114
          %1117 = dma.done %s1112, 512
        $region112: #{tpu_custom_call.1} parent=103 // pred_fallthru
          _
      $region104: #{tpu_custom_call.1} parent=5 // pred_fallthru
        _
    $region6: #{tpu_custom_call.1} parent=1 // loop_footer
      %s37 = sadd.s32 1, %s33
    $region7: #{tpu_custom_call.1} parent=1 // loop_footer_branch
      %32 = sbr.rel target = $region3
    $region8: #{tpu_custom_call.1} parent=1 // loop_exit
      _
    %1118 = vsyncpa [#allocation4], 1
    %s1119 = scalar_lea.sflag [#allocation4], 1
    %1120 = vsyncpa %s1119, 1
    %1121 = vsyncpa [#allocation7], 1
    %s1122 = scalar_lea.sflag [#allocation7], 1
    %1123 = vsyncpa %s1122, 1
    %1124 = vsyncpa [#allocation10], 1
    %1125 = vsyncpa [#allocation13], 1
    %1126 = vsyncpa [#allocation5], 1
    %s1127 = scalar_lea.sflag [#allocation5], 1
    %1128 = vsyncpa %s1127, 1
    %1129 = vsyncpa [#allocation17], 1
    %s1130 = scalar_lea.sflag [#allocation17], 1
    %1131 = vsyncpa %s1130, 1

</llo_original>
